<compile_context>
chip_gen: v7x
topology: tpu7x:2x2x1
jax: 0.10.0
libtpu: 0.0.40
codegen_flags: <defaults>
</compile_context>

<pallas_src>
import math
import functools

import jax
import jax.numpy as jnp
from jax.experimental import pallas as pl
from jax.experimental.pallas import tpu as pltpu

# ---------------- configuration (small synthetic sizes) ----------------
B = 2            # batch
S = 8            # sequence length
H = 32           # bert hidden
NH = 2           # attention heads
DH = H // NH     # head dim
FF = 4 * H       # feed-forward hidden
N_LAYERS = 2
VOCAB = 30
N_SEG = 3
FEAT = 9         # feat_size
N_LABELS = 3
LN_EPS = 1e-6
BS = B * S       # flattened token rows

WDTYPE = jnp.bfloat16   # MXU operand dtype (bf16-native on v6e/v7x)


# ---------------- kernel helpers ----------------
def _layernorm(v, g, b):
    mu = jnp.mean(v, axis=-1, keepdims=True)
    var = jnp.mean((v - mu) ** 2, axis=-1, keepdims=True)
    return (v - mu) * jax.lax.rsqrt(var + LN_EPS) * g + b


# ---------------- fused encoder + classifier kernel ----------------
def fused_bert_kernel(x0_ref, bias_ref, feat_ref,
                      wq_ref, bq_ref, wk_ref, bk_ref, wv_ref, bv_ref,
                      wo_ref, bo_ref,
                      ln1g_ref, ln1b_ref, ln2g_ref, ln2b_ref,
                      w1_ref, b1_ref, w2_ref, b2_ref,
                      wch_ref, wcf_ref, bc_ref,
                      logits_ref, x_scr,
                      *, n_batch, seq, nh, dh):
    layer = pl.program_id(0)

    @pl.when(layer == 0)
    def _():
        x_scr[...] = x0_ref[...]                      # residual stream init
        logits_ref[...] = jnp.zeros_like(logits_ref)  # defensive init

    x = x_scr[...]                                    # (B*S, H) f32
    bias = bias_ref[...]                              # (B, S) additive key mask

    # ---- multi-head self-attention sublayer (pre-norm) ----
    xn = _layernorm(x, ln1g_ref[...], ln1b_ref[...]).astype(WDTYPE)
    q = jnp.dot(xn, wq_ref[...], preferred_element_type=jnp.float32) + bq_ref[...]
    k = jnp.dot(xn, wk_ref[...], preferred_element_type=jnp.float32) + bk_ref[...]
    v = jnp.dot(xn, wv_ref[...], preferred_element_type=jnp.float32) + bv_ref[...]

    scale = 1.0 / math.sqrt(dh)
    batch_rows = []
    for b in range(n_batch):                          # static tiny loops
        bias_b = bias[b:b + 1, :]                     # (1, S) -> broadcast over queries
        rs = slice(b * seq, (b + 1) * seq)
        head_outs = []
        for h in range(nh):
            cs = slice(h * dh, (h + 1) * dh)
            qh, kh, vh = q[rs, cs], k[rs, cs], v[rs, cs]
            s = jnp.dot(qh, kh.T, preferred_element_type=jnp.float32) * scale + bias_b
            s_max = jnp.max(s, axis=-1, keepdims=True)
            p = jnp.exp(s - s_max)
            p = p * pl.reciprocal(jnp.sum(p, axis=-1, keepdims=True), approx=True)
            head_outs.append(jnp.dot(p, vh, preferred_element_type=jnp.float32))
        batch_rows.append(jnp.concatenate(head_outs, axis=-1))    # (S, H)
    o = jnp.concatenate(batch_rows, axis=0)                       # (B*S, H)

    attn = jnp.dot(o.astype(WDTYPE), wo_ref[...],
                   preferred_element_type=jnp.float32) + bo_ref[...]
    x = x + attn                                      # residual

    # ---- feed-forward sublayer (pre-norm, tanh-GELU) ----
    xn2 = _layernorm(x, ln2g_ref[...], ln2b_ref[...]).astype(WDTYPE)
    h1 = jnp.dot(xn2, w1_ref[...], preferred_element_type=jnp.float32) + b1_ref[...]
    h1 = jax.nn.gelu(h1, approximate=True).astype(WDTYPE)
    ffn = jnp.dot(h1, w2_ref[...], preferred_element_type=jnp.float32) + b2_ref[...]
    x = x + ffn                                       # residual
    x_scr[...] = x

    # ---- classifier head folded into the last layer ----
    @pl.when(layer == pl.num_programs(0) - 1)
    def _():
        cls = jnp.concatenate(
            [x[b * seq:b * seq + 1, :] for b in range(n_batch)], axis=0)  # (B, H)
        logits_ref[...] = (
            jnp.dot(cls, wch_ref[...], preferred_element_type=jnp.float32)
            + jnp.dot(feat_ref[...], wcf_ref[...], preferred_element_type=jnp.float32)
            + bc_ref[...])


# ---------------- wrapper ----------------
def sinusoidal_pe(seq_len, dim):
    pos = jnp.arange(seq_len, dtype=jnp.float32)[:, None]
    div = jnp.exp(jnp.arange(0, dim, 2, dtype=jnp.float32)
                  * (-math.log(10000.0) / dim))
    pe = jnp.zeros((seq_len, dim), jnp.float32)
    pe = pe.at[:, 0::2].set(jnp.sin(pos * div))
    pe = pe.at[:, 1::2].set(jnp.cos(pos * div))
    return pe


def bert_classifier_forward(params, token_ids, segment_label, feat):
    # ---- embedding (plain-JAX glue: gathers + PE) ----
    pe = sinusoidal_pe(S, H)
    x0 = (jnp.take(params["tok_emb"], token_ids, axis=0)
          + jnp.take(params["seg_emb"], segment_label, axis=0)
          + pe[None, :, :]).astype(jnp.float32).reshape(BS, H)
    # additive key-padding bias: 0 keep, -1e9 pad (hoisted out of the kernel loops)
    bias = jnp.where(token_ids > 0, 0.0, -1e9).astype(jnp.float32)      # (B, S)

    def wspec(shape):                      # per-layer stacked weight: block layer l
        n = len(shape)
        return pl.BlockSpec((None,) + shape, lambda l, n=n: (l,) + (0,) * n)

    def const_spec(shape):                 # whole array, same block every layer
        n = len(shape)
        return pl.BlockSpec(shape, lambda l, n=n: (0,) * n)

    grid_spec = pltpu.PrefetchScalarGridSpec(
        num_scalar_prefetch=0,
        grid=(N_LAYERS,),
        in_specs=[
            const_spec((BS, H)),                     # x0 (embeddings)
            const_spec((B, S)),                      # additive mask bias
            const_spec((B, FEAT)),                   # feat
            wspec((H, H)), wspec((1, H)),            # Wq, bq
            wspec((H, H)), wspec((1, H)),            # Wk, bk
            wspec((H, H)), wspec((1, H)),            # Wv, bv
            wspec((H, H)), wspec((1, H)),            # Wo, bo
            wspec((1, H)), wspec((1, H)),            # ln1 gamma/beta
            wspec((1, H)), wspec((1, H)),            # ln2 gamma/beta
            wspec((H, FF)), wspec((1, FF)),          # FFN W1, b1
            wspec((FF, H)), wspec((1, H)),           # FFN W2, b2
            const_spec((H, N_LABELS)),               # classifier W (hidden rows)
            const_spec((FEAT, N_LABELS)),            # classifier W (feat rows)
            const_spec((1, N_LABELS)),               # classifier b
        ],
        out_specs=pl.BlockSpec((B, N_LABELS), lambda l: (0, 0)),
        scratch_shapes=[pltpu.VMEM((BS, H), jnp.float32)],   # resident residual stream
    )

    kernel = functools.partial(fused_bert_kernel, n_batch=B, seq=S, nh=NH, dh=DH)
    logits = pl.pallas_call(
        kernel,
        out_shape=jax.ShapeDtypeStruct((B, N_LABELS), jnp.float32),
        grid_spec=grid_spec,
        compiler_params=pltpu.CompilerParams(dimension_semantics=("arbitrary",)),
    )(x0, bias, feat,
      params["wq"], params["bq"], params["wk"], params["bk"],
      params["wv"], params["bv"], params["wo"], params["bo"],
      params["ln1_g"], params["ln1_b"], params["ln2_g"], params["ln2_b"],
      params["w1"], params["b1"], params["w2"], params["b2"],
      params["w_cls"][:H, :], params["w_cls"][H:, :], params["b_cls"])
    return logits


# ---------------- deterministic parameter init ----------------
def init_params(key):
    keys = iter(jax.random.split(key, 64))

    def nrm(shape, dtype=jnp.float32, scale=0.02):
        return (scale * jax.random.normal(next(keys), shape)).astype(dtype)

    return {
        "tok_emb": nrm((VOCAB, H)),
        "seg_emb": nrm((N_SEG, H)),
        "w_cls": nrm((H + FEAT, N_LABELS)),
        "b_cls": jnp.zeros((1, N_LABELS), jnp.float32),
        # stacked per-layer encoder weights (leading N_LAYERS axis).
        # Matmul operands stored bf16 (MXU-native on v6e/v7x); biases / LN f32.
        "wq": nrm((N_LAYERS, H, H), WDTYPE),
        "bq": jnp.zeros((N_LAYERS, 1, H), jnp.float32),
        "wk": nrm((N_LAYERS, H, H), WDTYPE),
        "bk": jnp.zeros((N_LAYERS, 1, H), jnp.float32),
        "wv": nrm((N_LAYERS, H, H), WDTYPE),
        "bv": jnp.zeros((N_LAYERS, 1, H), jnp.float32),
        "wo": nrm((N_LAYERS, H, H), WDTYPE),
        "bo": jnp.zeros((N_LAYERS, 1, H), jnp.float32),
        "ln1_g": jnp.ones((N_LAYERS, 1, H), jnp.float32),
        "ln1_b": jnp.zeros((N_LAYERS, 1, H), jnp.float32),
        "ln2_g": jnp.ones((N_LAYERS, 1, H), jnp.float32),
        "ln2_b": jnp.zeros((N_LAYERS, 1, H), jnp.float32),
        "w1": nrm((N_LAYERS, H, FF), WDTYPE),
        "b1": jnp.zeros((N_LAYERS, 1, FF), jnp.float32),
        "w2": nrm((N_LAYERS, FF, H), WDTYPE),
        "b2": jnp.zeros((N_LAYERS, 1, H), jnp.float32),
    }


if __name__ == "__main__":
    key = jax.random.PRNGKey(0)
    kp, kx, ks, kf = jax.random.split(key, 4)
    params = init_params(kp)

    token_ids = jax.random.randint(kx, (B, S), 1, VOCAB, dtype=jnp.int32)
    segment_label = jax.random.randint(ks, (B, S), 1, N_SEG, dtype=jnp.int32)
    feat = jax.random.normal(kf, (B, FEAT), dtype=jnp.float32)

    logits = jax.jit(bert_classifier_forward)(params, token_ids, segment_label, feat)
    logits = jax.block_until_ready(logits)
    assert logits.shape == (B, N_LABELS)
    assert bool(jnp.all(jnp.isfinite(logits)))
    print("KERNEL_OK")
</pallas_src>

<mosaic_0001>
module attributes {stable_mosaic.version = 11 : i64} {
  func.func @fused_bert_kernel(%arg0: i32, %arg1: memref<16x32xf32, #tpu.memory_space<vmem>>, %arg2: memref<2x8xf32, #tpu.memory_space<vmem>>, %arg3: memref<2x9xf32, #tpu.memory_space<vmem>>, %arg4: memref<1x32x32xbf16, #tpu.memory_space<vmem>>, %arg5: memref<1x1x32xf32, #tpu.memory_space<vmem>>, %arg6: memref<1x32x32xbf16, #tpu.memory_space<vmem>>, %arg7: memref<1x1x32xf32, #tpu.memory_space<vmem>>, %arg8: memref<1x32x32xbf16, #tpu.memory_space<vmem>>, %arg9: memref<1x1x32xf32, #tpu.memory_space<vmem>>, %arg10: memref<1x32x32xbf16, #tpu.memory_space<vmem>>, %arg11: memref<1x1x32xf32, #tpu.memory_space<vmem>>, %arg12: memref<1x1x32xf32, #tpu.memory_space<vmem>>, %arg13: memref<1x1x32xf32, #tpu.memory_space<vmem>>, %arg14: memref<1x1x32xf32, #tpu.memory_space<vmem>>, %arg15: memref<1x1x32xf32, #tpu.memory_space<vmem>>, %arg16: memref<1x32x128xbf16, #tpu.memory_space<vmem>>, %arg17: memref<1x1x128xf32, #tpu.memory_space<vmem>>, %arg18: memref<1x128x32xbf16, #tpu.memory_space<vmem>>, %arg19: memref<1x1x32xf32, #tpu.memory_space<vmem>>, %arg20: memref<32x3xf32, #tpu.memory_space<vmem>>, %arg21: memref<9x3xf32, #tpu.memory_space<vmem>>, %arg22: memref<1x3xf32, #tpu.memory_space<vmem>>, %arg23: memref<2x3xf32, #tpu.memory_space<vmem>>, %arg24: memref<16x32xf32, #tpu.memory_space<vmem>>) attributes {dimension_semantics = [#tpu.dimension_semantics<arbitrary>], iteration_bounds = array<i64: 2>, scalar_prefetch = 0 : i64, scratch_operands = 1 : i64, tpu.core_type = #tpu.core_type<tc>, window_params = [{pipeline_mode = #tpu.pipeline_mode<synchronous>, transform_indices = @transform_0, window_bounds = array<i64: 16, 32>}, {pipeline_mode = #tpu.pipeline_mode<synchronous>, transform_indices = @transform_1, window_bounds = array<i64: 2, 8>}, {pipeline_mode = #tpu.pipeline_mode<synchronous>, transform_indices = @transform_2, window_bounds = array<i64: 2, 9>}, {transform_indices = @transform_3, window_bounds = array<i64: 1, 32, 32>}, {transform_indices = @transform_4, window_bounds = array<i64: 1, 1, 32>}, {transform_indices = @transform_5, window_bounds = array<i64: 1, 32, 32>}, {transform_indices = @transform_6, window_bounds = array<i64: 1, 1, 32>}, {transform_indices = @transform_7, window_bounds = array<i64: 1, 32, 32>}, {transform_indices = @transform_8, window_bounds = array<i64: 1, 1, 32>}, {transform_indices = @transform_9, window_bounds = array<i64: 1, 32, 32>}, {transform_indices = @transform_10, window_bounds = array<i64: 1, 1, 32>}, {transform_indices = @transform_11, window_bounds = array<i64: 1, 1, 32>}, {transform_indices = @transform_12, window_bounds = array<i64: 1, 1, 32>}, {transform_indices = @transform_13, window_bounds = array<i64: 1, 1, 32>}, {transform_indices = @transform_14, window_bounds = array<i64: 1, 1, 32>}, {transform_indices = @transform_15, window_bounds = array<i64: 1, 32, 128>}, {transform_indices = @transform_16, window_bounds = array<i64: 1, 1, 128>}, {transform_indices = @transform_17, window_bounds = array<i64: 1, 128, 32>}, {transform_indices = @transform_18, window_bounds = array<i64: 1, 1, 32>}, {pipeline_mode = #tpu.pipeline_mode<synchronous>, transform_indices = @transform_19, window_bounds = array<i64: 32, 3>}, {pipeline_mode = #tpu.pipeline_mode<synchronous>, transform_indices = @transform_20, window_bounds = array<i64: 9, 3>}, {pipeline_mode = #tpu.pipeline_mode<synchronous>, transform_indices = @transform_21, window_bounds = array<i64: 1, 3>}, {pipeline_mode = #tpu.pipeline_mode<synchronous>, transform_indices = @transform_22, window_bounds = array<i64: 2, 3>}]} {
    %c0_i32 = arith.constant 0 : i32
    %0 = arith.cmpi eq, %arg0, %c0_i32 : i32
    %1 = arith.extui %0 : i1 to i32
    %c0_i32_0 = arith.constant 0 : i32
    %2 = arith.cmpi ne, %1, %c0_i32_0 : i32
    scf.if %2 {
      %c0_94 = arith.constant 0 : index
      %c0_95 = arith.constant 0 : index
      %207 = vector.load %arg1[%c0_94, %c0_95] : memref<16x32xf32, #tpu.memory_space<vmem>>, vector<16x32xf32>
      %c0_96 = arith.constant 0 : index
      %c0_97 = arith.constant 0 : index
      %208 = vector.load %arg24[%c0_96, %c0_97] : memref<16x32xf32, #tpu.memory_space<vmem>>, vector<16x32xf32>
      tpu.vector_store %arg24[%c0_96, %c0_97], %207 {strides = array<i32>} : memref<16x32xf32, #tpu.memory_space<vmem>>, vector<16x32xf32>,
      %cst_98 = arith.constant 0.000000e+00 : f32
      %209 = vector.broadcast %cst_98 : f32 to vector<2x3xf32>
      %c0_99 = arith.constant 0 : index
      %c0_100 = arith.constant 0 : index
      %210 = vector.load %arg23[%c0_99, %c0_100] : memref<2x3xf32, #tpu.memory_space<vmem>>, vector<2x3xf32>
      tpu.vector_store %arg23[%c0_99, %c0_100], %209 {strides = array<i32>} : memref<2x3xf32, #tpu.memory_space<vmem>>, vector<2x3xf32>,
    } else {
    }
    %c0 = arith.constant 0 : index
    %c0_1 = arith.constant 0 : index
    %3 = vector.load %arg24[%c0, %c0_1] : memref<16x32xf32, #tpu.memory_space<vmem>>, vector<16x32xf32>
    %c0_2 = arith.constant 0 : index
    %c0_3 = arith.constant 0 : index
    %4 = vector.load %arg2[%c0_2, %c0_3] : memref<2x8xf32, #tpu.memory_space<vmem>>, vector<2x8xf32>
    %c0_4 = arith.constant 0 : index
    %c0_5 = arith.constant 0 : index
    %c0_6 = arith.constant 0 : index
    %5 = vector.load %arg12[%c0_4, %c0_5, %c0_6] : memref<1x1x32xf32, #tpu.memory_space<vmem>>, vector<1x1x32xf32>
    %6 = vector.shape_cast %5 : vector<1x1x32xf32> to vector<1x32xf32>
    %c0_7 = arith.constant 0 : index
    %c0_8 = arith.constant 0 : index
    %c0_9 = arith.constant 0 : index
    %7 = vector.load %arg13[%c0_7, %c0_8, %c0_9] : memref<1x1x32xf32, #tpu.memory_space<vmem>>, vector<1x1x32xf32>
    %8 = vector.shape_cast %7 : vector<1x1x32xf32> to vector<1x32xf32>
    %cst = arith.constant dense<0.000000e+00> : vector<16xf32>
    %9 = vector.multi_reduction <add>, %3, %cst [1] : vector<16x32xf32> to vector<16xf32>
    %10 = vector.shape_cast %9 : vector<16xf32> to vector<16x1xf32>
    %cst_10 = arith.constant 3.200000e+01 : f32
    %11 = vector.broadcast %cst_10 : f32 to vector<16x1xf32>
    %12 = arith.divf %10, %11 : vector<16x1xf32>
    %13 = vector.broadcast %12 : vector<16x1xf32> to vector<16x32xf32>
    %14 = arith.subf %3, %13 : vector<16x32xf32>
    %15 = arith.mulf %14, %14 : vector<16x32xf32>
    %cst_11 = arith.constant dense<0.000000e+00> : vector<16xf32>
    %16 = vector.multi_reduction <add>, %15, %cst_11 [1] : vector<16x32xf32> to vector<16xf32>
    %17 = vector.shape_cast %16 : vector<16xf32> to vector<16x1xf32>
    %cst_12 = arith.constant 3.200000e+01 : f32
    %18 = vector.broadcast %cst_12 : f32 to vector<16x1xf32>
    %19 = arith.divf %17, %18 : vector<16x1xf32>
    %20 = vector.broadcast %12 : vector<16x1xf32> to vector<16x32xf32>
    %21 = arith.subf %3, %20 : vector<16x32xf32>
    %cst_13 = arith.constant 9.99999997E-7 : f32
    %22 = vector.broadcast %cst_13 : f32 to vector<16x1xf32>
    %23 = arith.addf %19, %22 : vector<16x1xf32>
    %24 = math.rsqrt %23 : vector<16x1xf32>
    %25 = vector.broadcast %24 : vector<16x1xf32> to vector<16x32xf32>
    %26 = arith.mulf %21, %25 : vector<16x32xf32>
    %27 = vector.broadcast %6 : vector<1x32xf32> to vector<16x32xf32>
    %28 = arith.mulf %26, %27 : vector<16x32xf32>
    %29 = vector.broadcast %8 : vector<1x32xf32> to vector<16x32xf32>
    %30 = arith.addf %28, %29 : vector<16x32xf32>
    %31 = arith.truncf %30 : vector<16x32xf32> to vector<16x32xbf16>
    %c0_14 = arith.constant 0 : index
    %c0_15 = arith.constant 0 : index
    %c0_16 = arith.constant 0 : index
    %32 = vector.load %arg4[%c0_14, %c0_15, %c0_16] : memref<1x32x32xbf16, #tpu.memory_space<vmem>>, vector<1x32x32xbf16>
    %33 = vector.shape_cast %32 : vector<1x32x32xbf16> to vector<32x32xbf16>
    %cst_17 = arith.constant dense<0.000000e+00> : vector<16x32xf32>
    %34 = tpu.matmul %31, %33, %cst_17 {dimension_numbers = #tpu.dot_dimension_numbers<[1], [0], [0], [1], [0, 0, 1, 1], [], []>} : vector<16x32xbf16>, vector<32x32xbf16>, vector<16x32xf32> -> vector<16x32xf32>
    %c0_18 = arith.constant 0 : index
    %c0_19 = arith.constant 0 : index
    %c0_20 = arith.constant 0 : index
    %35 = vector.load %arg5[%c0_18, %c0_19, %c0_20] : memref<1x1x32xf32, #tpu.memory_space<vmem>>, vector<1x1x32xf32>
    %36 = vector.shape_cast %35 : vector<1x1x32xf32> to vector<1x32xf32>
    %37 = vector.broadcast %36 : vector<1x32xf32> to vector<16x32xf32>
    %38 = arith.addf %34, %37 : vector<16x32xf32>
    %c0_21 = arith.constant 0 : index
    %c0_22 = arith.constant 0 : index
    %c0_23 = arith.constant 0 : index
    %39 = vector.load %arg6[%c0_21, %c0_22, %c0_23] : memref<1x32x32xbf16, #tpu.memory_space<vmem>>, vector<1x32x32xbf16>
    %40 = vector.shape_cast %39 : vector<1x32x32xbf16> to vector<32x32xbf16>
    %cst_24 = arith.constant dense<0.000000e+00> : vector<16x32xf32>
    %41 = tpu.matmul %31, %40, %cst_24 {dimension_numbers = #tpu.dot_dimension_numbers<[1], [0], [0], [1], [0, 0, 1, 1], [], []>} : vector<16x32xbf16>, vector<32x32xbf16>, vector<16x32xf32> -> vector<16x32xf32>
    %c0_25 = arith.constant 0 : index
    %c0_26 = arith.constant 0 : index
    %c0_27 = arith.constant 0 : index
    %42 = vector.load %arg7[%c0_25, %c0_26, %c0_27] : memref<1x1x32xf32, #tpu.memory_space<vmem>>, vector<1x1x32xf32>
    %43 = vector.shape_cast %42 : vector<1x1x32xf32> to vector<1x32xf32>
    %44 = vector.broadcast %43 : vector<1x32xf32> to vector<16x32xf32>
    %45 = arith.addf %41, %44 : vector<16x32xf32>
    %c0_28 = arith.constant 0 : index
    %c0_29 = arith.constant 0 : index
    %c0_30 = arith.constant 0 : index
    %46 = vector.load %arg8[%c0_28, %c0_29, %c0_30] : memref<1x32x32xbf16, #tpu.memory_space<vmem>>, vector<1x32x32xbf16>
    %47 = vector.shape_cast %46 : vector<1x32x32xbf16> to vector<32x32xbf16>
    %cst_31 = arith.constant dense<0.000000e+00> : vector<16x32xf32>
    %48 = tpu.matmul %31, %47, %cst_31 {dimension_numbers = #tpu.dot_dimension_numbers<[1], [0], [0], [1], [0, 0, 1, 1], [], []>} : vector<16x32xbf16>, vector<32x32xbf16>, vector<16x32xf32> -> vector<16x32xf32>
    %c0_32 = arith.constant 0 : index
    %c0_33 = arith.constant 0 : index
    %c0_34 = arith.constant 0 : index
    %49 = vector.load %arg9[%c0_32, %c0_33, %c0_34] : memref<1x1x32xf32, #tpu.memory_space<vmem>>, vector<1x1x32xf32>
    %50 = vector.shape_cast %49 : vector<1x1x32xf32> to vector<1x32xf32>
    %51 = vector.broadcast %50 : vector<1x32xf32> to vector<16x32xf32>
    %52 = arith.addf %48, %51 : vector<16x32xf32>
    %53 = vector.extract_strided_slice %4 {offsets = [0, 0], sizes = [1, 8], strides = [1, 1]} : vector<2x8xf32> to vector<1x8xf32>
    %54 = vector.extract_strided_slice %38 {offsets = [0, 0], sizes = [8, 16], strides = [1, 1]} : vector<16x32xf32> to vector<8x16xf32>
    %55 = vector.extract_strided_slice %45 {offsets = [0, 0], sizes = [8, 16], strides = [1, 1]} : vector<16x32xf32> to vector<8x16xf32>
    %56 = vector.extract_strided_slice %52 {offsets = [0, 0], sizes = [8, 16], strides = [1, 1]} : vector<16x32xf32> to vector<8x16xf32>
    %57 = tpu.transpose %55, [1, 0] : vector<8x16xf32> -> vector<16x8xf32>
    %cst_35 = arith.constant dense<0.000000e+00> : vector<8x8xf32>
    %58 = tpu.matmul %54, %57, %cst_35 {dimension_numbers = #tpu.dot_dimension_numbers<[1], [0], [0], [1], [0, 0, 1, 1], [], []>} : vector<8x16xf32>, vector<16x8xf32>, vector<8x8xf32> -> vector<8x8xf32>
    %cst_36 = arith.constant 2.500000e-01 : f32
    %59 = vector.broadcast %cst_36 : f32 to vector<8x8xf32>
    %60 = arith.mulf %58, %59 : vector<8x8xf32>
    %61 = vector.broadcast %53 : vector<1x8xf32> to vector<8x8xf32>
    %62 = arith.addf %60, %61 : vector<8x8xf32>
    %cst_37 = arith.constant dense<0xFF800000> : vector<8xf32>
    %63 = vector.multi_reduction <maximumf>, %62, %cst_37 [1] : vector<8x8xf32> to vector<8xf32>
    %64 = vector.shape_cast %63 : vector<8xf32> to vector<8x1xf32>
    %65 = vector.broadcast %64 : vector<8x1xf32> to vector<8x8xf32>
    %66 = arith.subf %62, %65 : vector<8x8xf32>
    %67 = math.exp %66 : vector<8x8xf32>
    %cst_38 = arith.constant dense<0.000000e+00> : vector<8xf32>
    %68 = vector.multi_reduction <add>, %67, %cst_38 [1] : vector<8x8xf32> to vector<8xf32>
    %69 = vector.shape_cast %68 : vector<8xf32> to vector<8x1xf32>
    %70 = tpu.reciprocal %69 {approx = true} : vector<8x1xf32> -> vector<8x1xf32>
    %71 = vector.broadcast %70 : vector<8x1xf32> to vector<8x8xf32>
    %72 = arith.mulf %67, %71 : vector<8x8xf32>
    %cst_39 = arith.constant dense<0.000000e+00> : vector<8x16xf32>
    %73 = tpu.matmul %72, %56, %cst_39 {dimension_numbers = #tpu.dot_dimension_numbers<[1], [0], [0], [1], [0, 0, 1, 1], [], []>} : vector<8x8xf32>, vector<8x16xf32>, vector<8x16xf32> -> vector<8x16xf32>
    %74 = vector.extract_strided_slice %38 {offsets = [0, 16], sizes = [8, 16], strides = [1, 1]} : vector<16x32xf32> to vector<8x16xf32>
    %75 = vector.extract_strided_slice %45 {offsets = [0, 16], sizes = [8, 16], strides = [1, 1]} : vector<16x32xf32> to vector<8x16xf32>
    %76 = vector.extract_strided_slice %52 {offsets = [0, 16], sizes = [8, 16], strides = [1, 1]} : vector<16x32xf32> to vector<8x16xf32>
    %77 = tpu.transpose %75, [1, 0] : vector<8x16xf32> -> vector<16x8xf32>
    %cst_40 = arith.constant dense<0.000000e+00> : vector<8x8xf32>
    %78 = tpu.matmul %74, %77, %cst_40 {dimension_numbers = #tpu.dot_dimension_numbers<[1], [0], [0], [1], [0, 0, 1, 1], [], []>} : vector<8x16xf32>, vector<16x8xf32>, vector<8x8xf32> -> vector<8x8xf32>
    %cst_41 = arith.constant 2.500000e-01 : f32
    %79 = vector.broadcast %cst_41 : f32 to vector<8x8xf32>
    %80 = arith.mulf %78, %79 : vector<8x8xf32>
    %81 = vector.broadcast %53 : vector<1x8xf32> to vector<8x8xf32>
    %82 = arith.addf %80, %81 : vector<8x8xf32>
    %cst_42 = arith.constant dense<0xFF800000> : vector<8xf32>
    %83 = vector.multi_reduction <maximumf>, %82, %cst_42 [1] : vector<8x8xf32> to vector<8xf32>
    %84 = vector.shape_cast %83 : vector<8xf32> to vector<8x1xf32>
    %85 = vector.broadcast %84 : vector<8x1xf32> to vector<8x8xf32>
    %86 = arith.subf %82, %85 : vector<8x8xf32>
    %87 = math.exp %86 : vector<8x8xf32>
    %cst_43 = arith.constant dense<0.000000e+00> : vector<8xf32>
    %88 = vector.multi_reduction <add>, %87, %cst_43 [1] : vector<8x8xf32> to vector<8xf32>
    %89 = vector.shape_cast %88 : vector<8xf32> to vector<8x1xf32>
    %90 = tpu.reciprocal %89 {approx = true} : vector<8x1xf32> -> vector<8x1xf32>
    %91 = vector.broadcast %90 : vector<8x1xf32> to vector<8x8xf32>
    %92 = arith.mulf %87, %91 : vector<8x8xf32>
    %cst_44 = arith.constant dense<0.000000e+00> : vector<8x16xf32>
    %93 = tpu.matmul %92, %76, %cst_44 {dimension_numbers = #tpu.dot_dimension_numbers<[1], [0], [0], [1], [0, 0, 1, 1], [], []>} : vector<8x8xf32>, vector<8x16xf32>, vector<8x16xf32> -> vector<8x16xf32>
    %94 = tpu.concatenate %73, %93 in 1 : vector<8x16xf32>, vector<8x16xf32> -> vector<8x32xf32>
    %95 = vector.extract_strided_slice %4 {offsets = [1, 0], sizes = [1, 8], strides = [1, 1]} : vector<2x8xf32> to vector<1x8xf32>
    %96 = vector.extract_strided_slice %38 {offsets = [8, 0], sizes = [8, 16], strides = [1, 1]} : vector<16x32xf32> to vector<8x16xf32>
    %97 = vector.extract_strided_slice %45 {offsets = [8, 0], sizes = [8, 16], strides = [1, 1]} : vector<16x32xf32> to vector<8x16xf32>
    %98 = vector.extract_strided_slice %52 {offsets = [8, 0], sizes = [8, 16], strides = [1, 1]} : vector<16x32xf32> to vector<8x16xf32>
    %99 = tpu.transpose %97, [1, 0] : vector<8x16xf32> -> vector<16x8xf32>
    %cst_45 = arith.constant dense<0.000000e+00> : vector<8x8xf32>
    %100 = tpu.matmul %96, %99, %cst_45 {dimension_numbers = #tpu.dot_dimension_numbers<[1], [0], [0], [1], [0, 0, 1, 1], [], []>} : vector<8x16xf32>, vector<16x8xf32>, vector<8x8xf32> -> vector<8x8xf32>
    %cst_46 = arith.constant 2.500000e-01 : f32
    %101 = vector.broadcast %cst_46 : f32 to vector<8x8xf32>
    %102 = arith.mulf %100, %101 : vector<8x8xf32>
    %103 = vector.broadcast %95 : vector<1x8xf32> to vector<8x8xf32>
    %104 = arith.addf %102, %103 : vector<8x8xf32>
    %cst_47 = arith.constant dense<0xFF800000> : vector<8xf32>
    %105 = vector.multi_reduction <maximumf>, %104, %cst_47 [1] : vector<8x8xf32> to vector<8xf32>
    %106 = vector.shape_cast %105 : vector<8xf32> to vector<8x1xf32>
    %107 = vector.broadcast %106 : vector<8x1xf32> to vector<8x8xf32>
    %108 = arith.subf %104, %107 : vector<8x8xf32>
    %109 = math.exp %108 : vector<8x8xf32>
    %cst_48 = arith.constant dense<0.000000e+00> : vector<8xf32>
    %110 = vector.multi_reduction <add>, %109, %cst_48 [1] : vector<8x8xf32> to vector<8xf32>
    %111 = vector.shape_cast %110 : vector<8xf32> to vector<8x1xf32>
    %112 = tpu.reciprocal %111 {approx = true} : vector<8x1xf32> -> vector<8x1xf32>
    %113 = vector.broadcast %112 : vector<8x1xf32> to vector<8x8xf32>
    %114 = arith.mulf %109, %113 : vector<8x8xf32>
    %cst_49 = arith.constant dense<0.000000e+00> : vector<8x16xf32>
    %115 = tpu.matmul %114, %98, %cst_49 {dimension_numbers = #tpu.dot_dimension_numbers<[1], [0], [0], [1], [0, 0, 1, 1], [], []>} : vector<8x8xf32>, vector<8x16xf32>, vector<8x16xf32> -> vector<8x16xf32>
    %116 = vector.extract_strided_slice %38 {offsets = [8, 16], sizes = [8, 16], strides = [1, 1]} : vector<16x32xf32> to vector<8x16xf32>
    %117 = vector.extract_strided_slice %45 {offsets = [8, 16], sizes = [8, 16], strides = [1, 1]} : vector<16x32xf32> to vector<8x16xf32>
    %118 = vector.extract_strided_slice %52 {offsets = [8, 16], sizes = [8, 16], strides = [1, 1]} : vector<16x32xf32> to vector<8x16xf32>
    %119 = tpu.transpose %117, [1, 0] : vector<8x16xf32> -> vector<16x8xf32>
    %cst_50 = arith.constant dense<0.000000e+00> : vector<8x8xf32>
    %120 = tpu.matmul %116, %119, %cst_50 {dimension_numbers = #tpu.dot_dimension_numbers<[1], [0], [0], [1], [0, 0, 1, 1], [], []>} : vector<8x16xf32>, vector<16x8xf32>, vector<8x8xf32> -> vector<8x8xf32>
    %cst_51 = arith.constant 2.500000e-01 : f32
    %121 = vector.broadcast %cst_51 : f32 to vector<8x8xf32>
    %122 = arith.mulf %120, %121 : vector<8x8xf32>
    %123 = vector.broadcast %95 : vector<1x8xf32> to vector<8x8xf32>
    %124 = arith.addf %122, %123 : vector<8x8xf32>
    %cst_52 = arith.constant dense<0xFF800000> : vector<8xf32>
    %125 = vector.multi_reduction <maximumf>, %124, %cst_52 [1] : vector<8x8xf32> to vector<8xf32>
    %126 = vector.shape_cast %125 : vector<8xf32> to vector<8x1xf32>
    %127 = vector.broadcast %126 : vector<8x1xf32> to vector<8x8xf32>
    %128 = arith.subf %124, %127 : vector<8x8xf32>
    %129 = math.exp %128 : vector<8x8xf32>
    %cst_53 = arith.constant dense<0.000000e+00> : vector<8xf32>
    %130 = vector.multi_reduction <add>, %129, %cst_53 [1] : vector<8x8xf32> to vector<8xf32>
    %131 = vector.shape_cast %130 : vector<8xf32> to vector<8x1xf32>
    %132 = tpu.reciprocal %131 {approx = true} : vector<8x1xf32> -> vector<8x1xf32>
    %133 = vector.broadcast %132 : vector<8x1xf32> to vector<8x8xf32>
    %134 = arith.mulf %129, %133 : vector<8x8xf32>
    %cst_54 = arith.constant dense<0.000000e+00> : vector<8x16xf32>
    %135 = tpu.matmul %134, %118, %cst_54 {dimension_numbers = #tpu.dot_dimension_numbers<[1], [0], [0], [1], [0, 0, 1, 1], [], []>} : vector<8x8xf32>, vector<8x16xf32>, vector<8x16xf32> -> vector<8x16xf32>
    %136 = tpu.concatenate %115, %135 in 1 : vector<8x16xf32>, vector<8x16xf32> -> vector<8x32xf32>
    %137 = tpu.concatenate %94, %136 in 0 : vector<8x32xf32>, vector<8x32xf32> -> vector<16x32xf32>
    %138 = arith.truncf %137 : vector<16x32xf32> to vector<16x32xbf16>
    %c0_55 = arith.constant 0 : index
    %c0_56 = arith.constant 0 : index
    %c0_57 = arith.constant 0 : index
    %139 = vector.load %arg10[%c0_55, %c0_56, %c0_57] : memref<1x32x32xbf16, #tpu.memory_space<vmem>>, vector<1x32x32xbf16>
    %140 = vector.shape_cast %139 : vector<1x32x32xbf16> to vector<32x32xbf16>
    %cst_58 = arith.constant dense<0.000000e+00> : vector<16x32xf32>
    %141 = tpu.matmul %138, %140, %cst_58 {dimension_numbers = #tpu.dot_dimension_numbers<[1], [0], [0], [1], [0, 0, 1, 1], [], []>} : vector<16x32xbf16>, vector<32x32xbf16>, vector<16x32xf32> -> vector<16x32xf32>
    %c0_59 = arith.constant 0 : index
    %c0_60 = arith.constant 0 : index
    %c0_61 = arith.constant 0 : index
    %142 = vector.load %arg11[%c0_59, %c0_60, %c0_61] : memref<1x1x32xf32, #tpu.memory_space<vmem>>, vector<1x1x32xf32>
    %143 = vector.shape_cast %142 : vector<1x1x32xf32> to vector<1x32xf32>
    %144 = vector.broadcast %143 : vector<1x32xf32> to vector<16x32xf32>
    %145 = arith.addf %141, %144 : vector<16x32xf32>
    %146 = arith.addf %3, %145 : vector<16x32xf32>
    %c0_62 = arith.constant 0 : index
    %c0_63 = arith.constant 0 : index
    %c0_64 = arith.constant 0 : index
    %147 = vector.load %arg14[%c0_62, %c0_63, %c0_64] : memref<1x1x32xf32, #tpu.memory_space<vmem>>, vector<1x1x32xf32>
    %148 = vector.shape_cast %147 : vector<1x1x32xf32> to vector<1x32xf32>
    %c0_65 = arith.constant 0 : index
    %c0_66 = arith.constant 0 : index
    %c0_67 = arith.constant 0 : index
    %149 = vector.load %arg15[%c0_65, %c0_66, %c0_67] : memref<1x1x32xf32, #tpu.memory_space<vmem>>, vector<1x1x32xf32>
    %150 = vector.shape_cast %149 : vector<1x1x32xf32> to vector<1x32xf32>
    %cst_68 = arith.constant dense<0.000000e+00> : vector<16xf32>
    %151 = vector.multi_reduction <add>, %146, %cst_68 [1] : vector<16x32xf32> to vector<16xf32>
    %152 = vector.shape_cast %151 : vector<16xf32> to vector<16x1xf32>
    %cst_69 = arith.constant 3.200000e+01 : f32
    %153 = vector.broadcast %cst_69 : f32 to vector<16x1xf32>
    %154 = arith.divf %152, %153 : vector<16x1xf32>
    %155 = vector.broadcast %154 : vector<16x1xf32> to vector<16x32xf32>
    %156 = arith.subf %146, %155 : vector<16x32xf32>
    %157 = arith.mulf %156, %156 : vector<16x32xf32>
    %cst_70 = arith.constant dense<0.000000e+00> : vector<16xf32>
    %158 = vector.multi_reduction <add>, %157, %cst_70 [1] : vector<16x32xf32> to vector<16xf32>
    %159 = vector.shape_cast %158 : vector<16xf32> to vector<16x1xf32>
    %cst_71 = arith.constant 3.200000e+01 : f32
    %160 = vector.broadcast %cst_71 : f32 to vector<16x1xf32>
    %161 = arith.divf %159, %160 : vector<16x1xf32>
    %162 = vector.broadcast %154 : vector<16x1xf32> to vector<16x32xf32>
    %163 = arith.subf %146, %162 : vector<16x32xf32>
    %cst_72 = arith.constant 9.99999997E-7 : f32
    %164 = vector.broadcast %cst_72 : f32 to vector<16x1xf32>
    %165 = arith.addf %161, %164 : vector<16x1xf32>
    %166 = math.rsqrt %165 : vector<16x1xf32>
    %167 = vector.broadcast %166 : vector<16x1xf32> to vector<16x32xf32>
    %168 = arith.mulf %163, %167 : vector<16x32xf32>
    %169 = vector.broadcast %148 : vector<1x32xf32> to vector<16x32xf32>
    %170 = arith.mulf %168, %169 : vector<16x32xf32>
    %171 = vector.broadcast %150 : vector<1x32xf32> to vector<16x32xf32>
    %172 = arith.addf %170, %171 : vector<16x32xf32>
    %173 = arith.truncf %172 : vector<16x32xf32> to vector<16x32xbf16>
    %c0_73 = arith.constant 0 : index
    %c0_74 = arith.constant 0 : index
    %c0_75 = arith.constant 0 : index
    %174 = vector.load %arg16[%c0_73, %c0_74, %c0_75] : memref<1x32x128xbf16, #tpu.memory_space<vmem>>, vector<1x32x128xbf16>
    %175 = vector.shape_cast %174 : vector<1x32x128xbf16> to vector<32x128xbf16>
    %cst_76 = arith.constant dense<0.000000e+00> : vector<16x128xf32>
    %176 = tpu.matmul %173, %175, %cst_76 {dimension_numbers = #tpu.dot_dimension_numbers<[1], [0], [0], [1], [0, 0, 1, 1], [], []>} : vector<16x32xbf16>, vector<32x128xbf16>, vector<16x128xf32> -> vector<16x128xf32>
    %c0_77 = arith.constant 0 : index
    %c0_78 = arith.constant 0 : index
    %c0_79 = arith.constant 0 : index
    %177 = vector.load %arg17[%c0_77, %c0_78, %c0_79] : memref<1x1x128xf32, #tpu.memory_space<vmem>>, vector<1x1x128xf32>
    %178 = vector.shape_cast %177 : vector<1x1x128xf32> to vector<1x128xf32>
    %179 = vector.broadcast %178 : vector<1x128xf32> to vector<16x128xf32>
    %180 = arith.addf %176, %179 : vector<16x128xf32>
    %181 = arith.mulf %180, %180 : vector<16x128xf32>
    %182 = arith.mulf %180, %181 : vector<16x128xf32>
    %cst_80 = arith.constant 4.471500e-02 : f32
    %183 = vector.broadcast %cst_80 : f32 to vector<16x128xf32>
    %184 = arith.mulf %183, %182 : vector<16x128xf32>
    %185 = arith.addf %180, %184 : vector<16x128xf32>
    %cst_81 = arith.constant 0.797884583 : f32
    %186 = vector.broadcast %cst_81 : f32 to vector<16x128xf32>
    %187 = arith.mulf %186, %185 : vector<16x128xf32>
    %188 = math.tanh %187 : vector<16x128xf32>
    %cst_82 = arith.constant 1.000000e+00 : f32
    %189 = vector.broadcast %cst_82 : f32 to vector<16x128xf32>
    %190 = arith.addf %189, %188 : vector<16x128xf32>
    %cst_83 = arith.constant 5.000000e-01 : f32
    %191 = vector.broadcast %cst_83 : f32 to vector<16x128xf32>
    %192 = arith.mulf %191, %190 : vector<16x128xf32>
    %193 = arith.mulf %180, %192 : vector<16x128xf32>
    %194 = arith.truncf %193 : vector<16x128xf32> to vector<16x128xbf16>
    %c0_84 = arith.constant 0 : index
    %c0_85 = arith.constant 0 : index
    %c0_86 = arith.constant 0 : index
    %195 = vector.load %arg18[%c0_84, %c0_85, %c0_86] : memref<1x128x32xbf16, #tpu.memory_space<vmem>>, vector<1x128x32xbf16>
    %196 = vector.shape_cast %195 : vector<1x128x32xbf16> to vector<128x32xbf16>
    %cst_87 = arith.constant dense<0.000000e+00> : vector<16x32xf32>
    %197 = tpu.matmul %194, %196, %cst_87 {dimension_numbers = #tpu.dot_dimension_numbers<[1], [0], [0], [1], [0, 0, 1, 1], [], []>} : vector<16x128xbf16>, vector<128x32xbf16>, vector<16x32xf32> -> vector<16x32xf32>
    %c0_88 = arith.constant 0 : index
    %c0_89 = arith.constant 0 : index
    %c0_90 = arith.constant 0 : index
    %198 = vector.load %arg19[%c0_88, %c0_89, %c0_90] : memref<1x1x32xf32, #tpu.memory_space<vmem>>, vector<1x1x32xf32>
    %199 = vector.shape_cast %198 : vector<1x1x32xf32> to vector<1x32xf32>
    %200 = vector.broadcast %199 : vector<1x32xf32> to vector<16x32xf32>
    %201 = arith.addf %197, %200 : vector<16x32xf32>
    %202 = arith.addf %146, %201 : vector<16x32xf32>
    %c0_91 = arith.constant 0 : index
    %c0_92 = arith.constant 0 : index
    %203 = vector.load %arg24[%c0_91, %c0_92] : memref<16x32xf32, #tpu.memory_space<vmem>>, vector<16x32xf32>
    tpu.vector_store %arg24[%c0_91, %c0_92], %202 {strides = array<i32>} : memref<16x32xf32, #tpu.memory_space<vmem>>, vector<16x32xf32>,
    %c1_i32 = arith.constant 1 : i32
    %204 = arith.cmpi eq, %arg0, %c1_i32 : i32
    %205 = arith.extui %204 : i1 to i32
    %c0_i32_93 = arith.constant 0 : i32
    %206 = arith.cmpi ne, %205, %c0_i32_93 : i32
    scf.if %206 {
      %207 = vector.extract_strided_slice %202 {offsets = [0, 0], sizes = [1, 32], strides = [1, 1]} : vector<16x32xf32> to vector<1x32xf32>
      %208 = vector.extract_strided_slice %202 {offsets = [8, 0], sizes = [1, 32], strides = [1, 1]} : vector<16x32xf32> to vector<1x32xf32>
      %209 = tpu.concatenate %207, %208 in 0 : vector<1x32xf32>, vector<1x32xf32> -> vector<2x32xf32>
      %c0_94 = arith.constant 0 : index
      %c0_95 = arith.constant 0 : index
      %210 = vector.load %arg20[%c0_94, %c0_95] : memref<32x3xf32, #tpu.memory_space<vmem>>, vector<32x3xf32>
      %cst_96 = arith.constant dense<0.000000e+00> : vector<2x3xf32>
      %211 = tpu.matmul %209, %210, %cst_96 {dimension_numbers = #tpu.dot_dimension_numbers<[1], [0], [0], [1], [0, 0, 1, 1], [], []>} : vector<2x32xf32>, vector<32x3xf32>, vector<2x3xf32> -> vector<2x3xf32>
      %c0_97 = arith.constant 0 : index
      %c0_98 = arith.constant 0 : index
      %212 = vector.load %arg3[%c0_97, %c0_98] : memref<2x9xf32, #tpu.memory_space<vmem>>, vector<2x9xf32>
      %c0_99 = arith.constant 0 : index
      %c0_100 = arith.constant 0 : index
      %213 = vector.load %arg21[%c0_99, %c0_100] : memref<9x3xf32, #tpu.memory_space<vmem>>, vector<9x3xf32>
      %cst_101 = arith.constant dense<0.000000e+00> : vector<2x3xf32>
      %214 = tpu.matmul %212, %213, %cst_101 {dimension_numbers = #tpu.dot_dimension_numbers<[1], [0], [0], [1], [0, 0, 1, 1], [], []>} : vector<2x9xf32>, vector<9x3xf32>, vector<2x3xf32> -> vector<2x3xf32>
      %215 = arith.addf %211, %214 : vector<2x3xf32>
      %c0_102 = arith.constant 0 : index
      %c0_103 = arith.constant 0 : index
      %216 = vector.load %arg22[%c0_102, %c0_103] : memref<1x3xf32, #tpu.memory_space<vmem>>, vector<1x3xf32>
      %217 = vector.broadcast %216 : vector<1x3xf32> to vector<2x3xf32>
      %218 = arith.addf %215, %217 : vector<2x3xf32>
      %c0_104 = arith.constant 0 : index
      %c0_105 = arith.constant 0 : index
      %219 = vector.load %arg23[%c0_104, %c0_105] : memref<2x3xf32, #tpu.memory_space<vmem>>, vector<2x3xf32>
      tpu.vector_store %arg23[%c0_104, %c0_105], %218 {strides = array<i32>} : memref<2x3xf32, #tpu.memory_space<vmem>>, vector<2x3xf32>,
    } else {
    }
    return
  }
  func.func @transform_0(%arg0: i32) -> (i32, i32) {
    %c0_i32 = arith.constant 0 : i32
    %c0_i32_0 = arith.constant 0 : i32
    %c0_i32_1 = arith.constant 0 : i32
    return %c0_i32, %c0_i32_0 : i32, i32
  }
  func.func @transform_1(%arg0: i32) -> (i32, i32) {
    %c0_i32 = arith.constant 0 : i32
    %c0_i32_0 = arith.constant 0 : i32
    %c0_i32_1 = arith.constant 0 : i32
    return %c0_i32, %c0_i32_0 : i32, i32
  }
  func.func @transform_2(%arg0: i32) -> (i32, i32) {
    %c0_i32 = arith.constant 0 : i32
    %c0_i32_0 = arith.constant 0 : i32
    %c0_i32_1 = arith.constant 0 : i32
    return %c0_i32, %c0_i32_0 : i32, i32
  }
  func.func @transform_3(%arg0: i32) -> (i32, i32, i32) {
    %c0_i32 = arith.constant 0 : i32
    %c0_i32_0 = arith.constant 0 : i32
    %c0_i32_1 = arith.constant 0 : i32
    return %arg0, %c0_i32, %c0_i32_0 : i32, i32, i32
  }
  func.func @transform_4(%arg0: i32) -> (i32, i32, i32) {
    %c0_i32 = arith.constant 0 : i32
    %c0_i32_0 = arith.constant 0 : i32
    %c0_i32_1 = arith.constant 0 : i32
    return %arg0, %c0_i32, %c0_i32_0 : i32, i32, i32
  }
  func.func @transform_5(%arg0: i32) -> (i32, i32, i32) {
    %c0_i32 = arith.constant 0 : i32
    %c0_i32_0 = arith.constant 0 : i32
    %c0_i32_1 = arith.constant 0 : i32
    return %arg0, %c0_i32, %c0_i32_0 : i32, i32, i32
  }
  func.func @transform_6(%arg0: i32) -> (i32, i32, i32) {
    %c0_i32 = arith.constant 0 : i32
    %c0_i32_0 = arith.constant 0 : i32
    %c0_i32_1 = arith.constant 0 : i32
    return %arg0, %c0_i32, %c0_i32_0 : i32, i32, i32
  }
  func.func @transform_7(%arg0: i32) -> (i32, i32, i32) {
    %c0_i32 = arith.constant 0 : i32
    %c0_i32_0 = arith.constant 0 : i32
    %c0_i32_1 = arith.constant 0 : i32
    return %arg0, %c0_i32, %c0_i32_0 : i32, i32, i32
  }
  func.func @transform_8(%arg0: i32) -> (i32, i32, i32) {
    %c0_i32 = arith.constant 0 : i32
    %c0_i32_0 = arith.constant 0 : i32
    %c0_i32_1 = arith.constant 0 : i32
    return %arg0, %c0_i32, %c0_i32_0 : i32, i32, i32
  }
  func.func @transform_9(%arg0: i32) -> (i32, i32, i32) {
    %c0_i32 = arith.constant 0 : i32
    %c0_i32_0 = arith.constant 0 : i32
    %c0_i32_1 = arith.constant 0 : i32
    return %arg0, %c0_i32, %c0_i32_0 : i32, i32, i32
  }
  func.func @transform_10(%arg0: i32) -> (i32, i32, i32) {
    %c0_i32 = arith.constant 0 : i32
    %c0_i32_0 = arith.constant 0 : i32
    %c0_i32_1 = arith.constant 0 : i32
    return %arg0, %c0_i32, %c0_i32_0 : i32, i32, i32
  }
  func.func @transform_11(%arg0: i32) -> (i32, i32, i32) {
    %c0_i32 = arith.constant 0 : i32
    %c0_i32_0 = arith.constant 0 : i32
    %c0_i32_1 = arith.constant 0 : i32
    return %arg0, %c0_i32, %c0_i32_0 : i32, i32, i32
  }
  func.func @transform_12(%arg0: i32) -> (i32, i32, i32) {
    %c0_i32 = arith.constant 0 : i32
    %c0_i32_0 = arith.constant 0 : i32
    %c0_i32_1 = arith.constant 0 : i32
    return %arg0, %c0_i32, %c0_i32_0 : i32, i32, i32
  }
  func.func @transform_13(%arg0: i32) -> (i32, i32, i32) {
    %c0_i32 = arith.constant 0 : i32
    %c0_i32_0 = arith.constant 0 : i32
    %c0_i32_1 = arith.constant 0 : i32
    return %arg0, %c0_i32, %c0_i32_0 : i32, i32, i32
  }
  func.func @transform_14(%arg0: i32) -> (i32, i32, i32) {
    %c0_i32 = arith.constant 0 : i32
    %c0_i32_0 = arith.constant 0 : i32
    %c0_i32_1 = arith.constant 0 : i32
    return %arg0, %c0_i32, %c0_i32_0 : i32, i32, i32
  }
  func.func @transform_15(%arg0: i32) -> (i32, i32, i32) {
    %c0_i32 = arith.constant 0 : i32
    %c0_i32_0 = arith.constant 0 : i32
    %c0_i32_1 = arith.constant 0 : i32
    return %arg0, %c0_i32, %c0_i32_0 : i32, i32, i32
  }
  func.func @transform_16(%arg0: i32) -> (i32, i32, i32) {
    %c0_i32 = arith.constant 0 : i32
    %c0_i32_0 = arith.constant 0 : i32
    %c0_i32_1 = arith.constant 0 : i32
    return %arg0, %c0_i32, %c0_i32_0 : i32, i32, i32
  }
  func.func @transform_17(%arg0: i32) -> (i32, i32, i32) {
    %c0_i32 = arith.constant 0 : i32
    %c0_i32_0 = arith.constant 0 : i32
    %c0_i32_1 = arith.constant 0 : i32
    return %arg0, %c0_i32, %c0_i32_0 : i32, i32, i32
  }
  func.func @transform_18(%arg0: i32) -> (i32, i32, i32) {
    %c0_i32 = arith.constant 0 : i32
    %c0_i32_0 = arith.constant 0 : i32
    %c0_i32_1 = arith.constant 0 : i32
    return %arg0, %c0_i32, %c0_i32_0 : i32, i32, i32
  }
  func.func @transform_19(%arg0: i32) -> (i32, i32) {
    %c0_i32 = arith.constant 0 : i32
    %c0_i32_0 = arith.constant 0 : i32
    %c0_i32_1 = arith.constant 0 : i32
    return %c0_i32, %c0_i32_0 : i32, i32
  }
  func.func @transform_20(%arg0: i32) -> (i32, i32) {
    %c0_i32 = arith.constant 0 : i32
    %c0_i32_0 = arith.constant 0 : i32
    %c0_i32_1 = arith.constant 0 : i32
    return %c0_i32, %c0_i32_0 : i32, i32
  }
  func.func @transform_21(%arg0: i32) -> (i32, i32) {
    %c0_i32 = arith.constant 0 : i32
    %c0_i32_0 = arith.constant 0 : i32
    %c0_i32_1 = arith.constant 0 : i32
    return %c0_i32, %c0_i32_0 : i32, i32
  }
  func.func @transform_22(%arg0: i32) -> (i32, i32) {
    %c0_i32 = arith.constant 0 : i32
    %c0_i32_0 = arith.constant 0 : i32
    %c0_i32_1 = arith.constant 0 : i32
    return %c0_i32, %c0_i32_0 : i32, i32
  }
}

</mosaic_0001>

<llo_original>
// kernel: bert_classifier_forward.1
$region0: #{bert_classifier_forward.1}
  #allocation0 [shape = 'u32[]', space=smem, size = 0x4, offset = 0x4, fixed_abs, tag = 'smem constant byte address 0x4 - core index']
  #allocation1 [shape = 'u32[144,128]{1,0:T(1,128)}', space=vmem, size = 0x12000, scoped, tag = 'internal scratch']
  #allocation2 [shape = 'f32[16,32]{1,0:T(8,128)}', space=vmem, size = 0x2000, scoped, tag = 'scratch operand']
  %s0 = inlined_call_operand.vmem [shape: f32[16,32], index: 0, kind: input, shape index: {}]
  %s1 = inlined_call_operand.vmem [shape: f32[2,8], index: 1, kind: input, shape index: {}]
  %s2 = inlined_call_operand.vmem [shape: f32[2,9], index: 2, kind: input, shape index: {}]
  %s3 = inlined_call_operand.vmem [shape: bf16[2,32,32], index: 3, kind: input, shape index: {}]
  %s4 = inlined_call_operand.vmem [shape: f32[2,1,32], index: 4, kind: input, shape index: {}]
  %s5 = inlined_call_operand.vmem [shape: bf16[2,32,32], index: 5, kind: input, shape index: {}]
  %s6 = inlined_call_operand.vmem [shape: f32[2,1,32], index: 6, kind: input, shape index: {}]
  %s7 = inlined_call_operand.vmem [shape: bf16[2,32,32], index: 7, kind: input, shape index: {}]
  %s8 = inlined_call_operand.vmem [shape: f32[2,1,32], index: 8, kind: input, shape index: {}]
  %s9 = inlined_call_operand.vmem [shape: bf16[2,32,32], index: 9, kind: input, shape index: {}]
  %s10 = inlined_call_operand.vmem [shape: f32[2,1,32], index: 10, kind: input, shape index: {}]
  %s11 = inlined_call_operand.vmem [shape: f32[2,1,32], index: 11, kind: input, shape index: {}]
  %s12 = inlined_call_operand.vmem [shape: f32[2,1,32], index: 12, kind: input, shape index: {}]
  %s13 = inlined_call_operand.vmem [shape: f32[2,1,32], index: 13, kind: input, shape index: {}]
  %s14 = inlined_call_operand.vmem [shape: f32[2,1,32], index: 14, kind: input, shape index: {}]
  %s15 = inlined_call_operand.vmem [shape: bf16[2,32,128], index: 15, kind: input, shape index: {}]
  %s16 = inlined_call_operand.vmem [shape: f32[2,1,128], index: 16, kind: input, shape index: {}]
  %s17 = inlined_call_operand.vmem [shape: bf16[2,128,32], index: 17, kind: input, shape index: {}]
  %s18 = inlined_call_operand.vmem [shape: f32[2,1,32], index: 18, kind: input, shape index: {}]
  %s19 = inlined_call_operand.vmem [shape: f32[32,3], index: 19, kind: input, shape index: {}]
  %s20 = inlined_call_operand.vmem [shape: f32[9,3], index: 20, kind: input, shape index: {}]
  %s21 = inlined_call_operand.vmem [shape: f32[1,3], index: 21, kind: input, shape index: {}]
  %s22 = inlined_call_operand.hbm [shape: f32[2,3], index: 22, kind: output, shape index: {}]
  %s23 = sld [smem:[#allocation0]]
  $region129: #{bert_classifier_forward.1} parent=0
    _
  %s25 = ssub.s32 1, %s23
  %s26 = scalar_select 0, %s25, %s23
  $region1: #{bert_classifier_forward.1} parent=0
    #allocation3 [shape = 'u8[1024]{0}', space=vmem, size = 0x400, scoped, tag = 'output window, operand 0, single buffered']
    #allocation4 [shape = 's32[2]{0}', space=sflag, size = 0x8, scoped, tag = 'scoped memory for bert_classifier_forward.1']
    %27 = vsyncpa [#allocation4], 0
    loop: start=0, step=1, limit=4
    $region2: #{bert_classifier_forward.1} parent=1 // loop_pre_header
      _
    $region3: #{bert_classifier_forward.1} parent=1 // loop_header
      %s29 = sphi 0, %s33
      %p30 = scmp.ge.s32.totalorder %s29, 4
      %s37 = sphi 0, %s37
      %s39 = sphi 0, %s37
      %s40 = sphi 0, %s39
      %s54 = sphi 0, %s40
      %s58 = sphi 0, %s58
      %s60 = sphi 0, %s58
      %s61 = sphi 0, %s60
      %s75 = sphi 0, %s61
      %s79 = sphi 0, %s79
      %s81 = sphi 0, %s79
      %s82 = sphi 0, %s81
      %s96 = sphi 0, %s82
      %s102 = sphi 0, %s104
      %s105 = sphi 0, %s102
      %s106 = sphi 0, %s105
      %s122 = sphi 0, %s106
      %s128 = sphi 0, %s130
      %s131 = sphi 0, %s128
      %s132 = sphi 0, %s131
      %s148 = sphi 0, %s132
      %s154 = sphi 0, %s156
      %s157 = sphi 0, %s154
      %s158 = sphi 0, %s157
      %s174 = sphi 0, %s158
      %s180 = sphi 0, %s182
      %s183 = sphi 0, %s180
      %s184 = sphi 0, %s183
      %s200 = sphi 0, %s184
      %s206 = sphi 0, %s208
      %s209 = sphi 0, %s206
      %s210 = sphi 0, %s209
      %s226 = sphi 0, %s210
      %s232 = sphi 0, %s234
      %s235 = sphi 0, %s232
      %s236 = sphi 0, %s235
      %s252 = sphi 0, %s236
      %s258 = sphi 0, %s260
      %s261 = sphi 0, %s258
      %s262 = sphi 0, %s261
      %s278 = sphi 0, %s262
      %s284 = sphi 0, %s286
      %s287 = sphi 0, %s284
      %s288 = sphi 0, %s287
      %s304 = sphi 0, %s288
      %s310 = sphi 0, %s312
      %s313 = sphi 0, %s310
      %s314 = sphi 0, %s313
      %s330 = sphi 0, %s314
      %s336 = sphi 0, %s338
      %s339 = sphi 0, %s336
      %s340 = sphi 0, %s339
      %s356 = sphi 0, %s340
      %s362 = sphi 0, %s364
      %s365 = sphi 0, %s362
      %s366 = sphi 0, %s365
      %s382 = sphi 0, %s366
      %s388 = sphi 0, %s390
      %s391 = sphi 0, %s388
      %s392 = sphi 0, %s391
      %s408 = sphi 0, %s392
      %s414 = sphi 0, %s416
      %s417 = sphi 0, %s414
      %s418 = sphi 0, %s417
      %s434 = sphi 0, %s418
      %s440 = sphi 0, %s442
      %s443 = sphi 0, %s440
      %s444 = sphi 0, %s443
      %s460 = sphi 0, %s444
      %s466 = sphi 0, %s468
      %s469 = sphi 0, %s466
      %s470 = sphi 0, %s469
      %s486 = sphi 0, %s470
      %s492 = sphi 0, %s494
      %s495 = sphi 0, %s492
      %s496 = sphi 0, %s495
      %s512 = sphi 0, %s496
      %s516 = sphi 0, %s516
      %s518 = sphi 0, %s516
      %s519 = sphi 0, %s518
      %s533 = sphi 0, %s519
      %s537 = sphi 0, %s537
      %s539 = sphi 0, %s537
      %s540 = sphi 0, %s539
      %s554 = sphi 0, %s540
      %s558 = sphi 0, %s558
      %s560 = sphi 0, %s558
      %s561 = sphi 0, %s560
      %s575 = sphi 0, %s561
      %s579 = sphi 0, %s579
      %s581 = sphi 0, %s579
      %s582 = sphi 0, %s581
      %s596 = sphi 0, %s582
    $region4: #{bert_classifier_forward.1} parent=1 // loop_header_branch
      %32 = sbr.rel (%p30) target = $region8
    $region5: #{bert_classifier_forward.1} parent=1 // loop_body
      %s34 = ssub.s32 %s29, 1
      %s35 = ssub.s32 %s29, 2
      %s36 = sadd.s32 %s29, 1
      %s38 = sadd.s32 %s37, 1
      %p41 = scmp.eq.s32.totalorder %s29, 1
      %p42 = scmp.ne.s32.totalorder %s37, %s39
      %p43 = scmp.eq.s32.totalorder %s29, 0
      %p44 = por %p42, %p43
      %p45 = scmp.ne.s32.totalorder %s37, %s39
      %p46 = scmp.eq.s32.totalorder %s34, 1
      %p47 = por %p45, %p46
      %p48 = scmp.ne.s32.totalorder %s39, %s40
      %p49 = scmp.eq.s32.totalorder %s34, 0
      %p50 = por %p48, %p49
      %p51 = scmp.ne.s32.totalorder %s39, %s40
      %p52 = scmp.eq.s32.totalorder %s35, 1
      %p53 = por %p51, %p52
      %p55 = scmp.ne.s32.totalorder %s40, %s54
      %p56 = scmp.eq.s32.totalorder %s35, 0
      %p57 = por %p55, %p56
      %s59 = sadd.s32 %s58, 1
      %p62 = scmp.eq.s32.totalorder %s29, 1
      %p63 = scmp.ne.s32.totalorder %s58, %s60
      %p64 = scmp.eq.s32.totalorder %s29, 0
      %p65 = por %p63, %p64
      %p66 = scmp.ne.s32.totalorder %s58, %s60
      %p67 = scmp.eq.s32.totalorder %s34, 1
      %p68 = por %p66, %p67
      %p69 = scmp.ne.s32.totalorder %s60, %s61
      %p70 = scmp.eq.s32.totalorder %s34, 0
      %p71 = por %p69, %p70
      %p72 = scmp.ne.s32.totalorder %s60, %s61
      %p73 = scmp.eq.s32.totalorder %s35, 1
      %p74 = por %p72, %p73
      %p76 = scmp.ne.s32.totalorder %s61, %s75
      %p77 = scmp.eq.s32.totalorder %s35, 0
      %p78 = por %p76, %p77
      %s80 = sadd.s32 %s79, 1
      %p83 = scmp.eq.s32.totalorder %s29, 1
      %p84 = scmp.ne.s32.totalorder %s79, %s81
      %p85 = scmp.eq.s32.totalorder %s29, 0
      %p86 = por %p84, %p85
      %p87 = scmp.ne.s32.totalorder %s79, %s81
      %p88 = scmp.eq.s32.totalorder %s34, 1
      %p89 = por %p87, %p88
      %p90 = scmp.ne.s32.totalorder %s81, %s82
      %p91 = scmp.eq.s32.totalorder %s34, 0
      %p92 = por %p90, %p91
      %p93 = scmp.ne.s32.totalorder %s81, %s82
      %p94 = scmp.eq.s32.totalorder %s35, 1
      %p95 = por %p93, %p94
      %p97 = scmp.ne.s32.totalorder %s82, %s96
      %p98 = scmp.eq.s32.totalorder %s35, 0
      %p99 = por %p97, %p98
      %s100 = ssub.s32 %s29, %s36
      %p101 = scmp.eq.s32.totalorder %s100, 0
      %s103 = sadd.s32 %s102, 1
      %s104 = scalar_select %p101, %s102, %s103
      %p107 = pneg %p101
      %p108 = scmp.eq.s32.totalorder %s29, 1
      %p109 = por %p107, %p108
      %p110 = scmp.ne.s32.totalorder %s102, %s105
      %p111 = scmp.eq.s32.totalorder %s29, 0
      %p112 = por %p110, %p111
      %p113 = scmp.ne.s32.totalorder %s102, %s105
      %p114 = scmp.eq.s32.totalorder %s34, 1
      %p115 = por %p113, %p114
      %p116 = scmp.ne.s32.totalorder %s105, %s106
      %p117 = scmp.eq.s32.totalorder %s34, 0
      %p118 = por %p116, %p117
      %p119 = scmp.ne.s32.totalorder %s105, %s106
      %p120 = scmp.eq.s32.totalorder %s35, 1
      %p121 = por %p119, %p120
      %p123 = scmp.ne.s32.totalorder %s106, %s122
      %p124 = scmp.eq.s32.totalorder %s35, 0
      %p125 = por %p123, %p124
      %s126 = ssub.s32 %s29, %s36
      %p127 = scmp.eq.s32.totalorder %s126, 0
      %s129 = sadd.s32 %s128, 1
      %s130 = scalar_select %p127, %s128, %s129
      %p133 = pneg %p127
      %p134 = scmp.eq.s32.totalorder %s29, 1
      %p135 = por %p133, %p134
      %p136 = scmp.ne.s32.totalorder %s128, %s131
      %p137 = scmp.eq.s32.totalorder %s29, 0
      %p138 = por %p136, %p137
      %p139 = scmp.ne.s32.totalorder %s128, %s131
      %p140 = scmp.eq.s32.totalorder %s34, 1
      %p141 = por %p139, %p140
      %p142 = scmp.ne.s32.totalorder %s131, %s132
      %p143 = scmp.eq.s32.totalorder %s34, 0
      %p144 = por %p142, %p143
      %p145 = scmp.ne.s32.totalorder %s131, %s132
      %p146 = scmp.eq.s32.totalorder %s35, 1
      %p147 = por %p145, %p146
      %p149 = scmp.ne.s32.totalorder %s132, %s148
      %p150 = scmp.eq.s32.totalorder %s35, 0
      %p151 = por %p149, %p150
      %s152 = ssub.s32 %s29, %s36
      %p153 = scmp.eq.s32.totalorder %s152, 0
      %s155 = sadd.s32 %s154, 1
      %s156 = scalar_select %p153, %s154, %s155
      %p159 = pneg %p153
      %p160 = scmp.eq.s32.totalorder %s29, 1
      %p161 = por %p159, %p160
      %p162 = scmp.ne.s32.totalorder %s154, %s157
      %p163 = scmp.eq.s32.totalorder %s29, 0
      %p164 = por %p162, %p163
      %p165 = scmp.ne.s32.totalorder %s154, %s157
      %p166 = scmp.eq.s32.totalorder %s34, 1
      %p167 = por %p165, %p166
      %p168 = scmp.ne.s32.totalorder %s157, %s158
      %p169 = scmp.eq.s32.totalorder %s34, 0
      %p170 = por %p168, %p169
      %p171 = scmp.ne.s32.totalorder %s157, %s158
      %p172 = scmp.eq.s32.totalorder %s35, 1
      %p173 = por %p171, %p172
      %p175 = scmp.ne.s32.totalorder %s158, %s174
      %p176 = scmp.eq.s32.totalorder %s35, 0
      %p177 = por %p175, %p176
      %s178 = ssub.s32 %s29, %s36
      %p179 = scmp.eq.s32.totalorder %s178, 0
      %s181 = sadd.s32 %s180, 1
      %s182 = scalar_select %p179, %s180, %s181
      %p185 = pneg %p179
      %p186 = scmp.eq.s32.totalorder %s29, 1
      %p187 = por %p185, %p186
      %p188 = scmp.ne.s32.totalorder %s180, %s183
      %p189 = scmp.eq.s32.totalorder %s29, 0
      %p190 = por %p188, %p189
      %p191 = scmp.ne.s32.totalorder %s180, %s183
      %p192 = scmp.eq.s32.totalorder %s34, 1
      %p193 = por %p191, %p192
      %p194 = scmp.ne.s32.totalorder %s183, %s184
      %p195 = scmp.eq.s32.totalorder %s34, 0
      %p196 = por %p194, %p195
      %p197 = scmp.ne.s32.totalorder %s183, %s184
      %p198 = scmp.eq.s32.totalorder %s35, 1
      %p199 = por %p197, %p198
      %p201 = scmp.ne.s32.totalorder %s184, %s200
      %p202 = scmp.eq.s32.totalorder %s35, 0
      %p203 = por %p201, %p202
      %s204 = ssub.s32 %s29, %s36
      %p205 = scmp.eq.s32.totalorder %s204, 0
      %s207 = sadd.s32 %s206, 1
      %s208 = scalar_select %p205, %s206, %s207
      %p211 = pneg %p205
      %p212 = scmp.eq.s32.totalorder %s29, 1
      %p213 = por %p211, %p212
      %p214 = scmp.ne.s32.totalorder %s206, %s209
      %p215 = scmp.eq.s32.totalorder %s29, 0
      %p216 = por %p214, %p215
      %p217 = scmp.ne.s32.totalorder %s206, %s209
      %p218 = scmp.eq.s32.totalorder %s34, 1
      %p219 = por %p217, %p218
      %p220 = scmp.ne.s32.totalorder %s209, %s210
      %p221 = scmp.eq.s32.totalorder %s34, 0
      %p222 = por %p220, %p221
      %p223 = scmp.ne.s32.totalorder %s209, %s210
      %p224 = scmp.eq.s32.totalorder %s35, 1
      %p225 = por %p223, %p224
      %p227 = scmp.ne.s32.totalorder %s210, %s226
      %p228 = scmp.eq.s32.totalorder %s35, 0
      %p229 = por %p227, %p228
      %s230 = ssub.s32 %s29, %s36
      %p231 = scmp.eq.s32.totalorder %s230, 0
      %s233 = sadd.s32 %s232, 1
      %s234 = scalar_select %p231, %s232, %s233
      %p237 = pneg %p231
      %p238 = scmp.eq.s32.totalorder %s29, 1
      %p239 = por %p237, %p238
      %p240 = scmp.ne.s32.totalorder %s232, %s235
      %p241 = scmp.eq.s32.totalorder %s29, 0
      %p242 = por %p240, %p241
      %p243 = scmp.ne.s32.totalorder %s232, %s235
      %p244 = scmp.eq.s32.totalorder %s34, 1
      %p245 = por %p243, %p244
      %p246 = scmp.ne.s32.totalorder %s235, %s236
      %p247 = scmp.eq.s32.totalorder %s34, 0
      %p248 = por %p246, %p247
      %p249 = scmp.ne.s32.totalorder %s235, %s236
      %p250 = scmp.eq.s32.totalorder %s35, 1
      %p251 = por %p249, %p250
      %p253 = scmp.ne.s32.totalorder %s236, %s252
      %p254 = scmp.eq.s32.totalorder %s35, 0
      %p255 = por %p253, %p254
      %s256 = ssub.s32 %s29, %s36
      %p257 = scmp.eq.s32.totalorder %s256, 0
      %s259 = sadd.s32 %s258, 1
      %s260 = scalar_select %p257, %s258, %s259
      %p263 = pneg %p257
      %p264 = scmp.eq.s32.totalorder %s29, 1
      %p265 = por %p263, %p264
      %p266 = scmp.ne.s32.totalorder %s258, %s261
      %p267 = scmp.eq.s32.totalorder %s29, 0
      %p268 = por %p266, %p267
      %p269 = scmp.ne.s32.totalorder %s258, %s261
      %p270 = scmp.eq.s32.totalorder %s34, 1
      %p271 = por %p269, %p270
      %p272 = scmp.ne.s32.totalorder %s261, %s262
      %p273 = scmp.eq.s32.totalorder %s34, 0
      %p274 = por %p272, %p273
      %p275 = scmp.ne.s32.totalorder %s261, %s262
      %p276 = scmp.eq.s32.totalorder %s35, 1
      %p277 = por %p275, %p276
      %p279 = scmp.ne.s32.totalorder %s262, %s278
      %p280 = scmp.eq.s32.totalorder %s35, 0
      %p281 = por %p279, %p280
      %s282 = ssub.s32 %s29, %s36
      %p283 = scmp.eq.s32.totalorder %s282, 0
      %s285 = sadd.s32 %s284, 1
      %s286 = scalar_select %p283, %s284, %s285
      %p289 = pneg %p283
      %p290 = scmp.eq.s32.totalorder %s29, 1
      %p291 = por %p289, %p290
      %p292 = scmp.ne.s32.totalorder %s284, %s287
      %p293 = scmp.eq.s32.totalorder %s29, 0
      %p294 = por %p292, %p293
      %p295 = scmp.ne.s32.totalorder %s284, %s287
      %p296 = scmp.eq.s32.totalorder %s34, 1
      %p297 = por %p295, %p296
      %p298 = scmp.ne.s32.totalorder %s287, %s288
      %p299 = scmp.eq.s32.totalorder %s34, 0
      %p300 = por %p298, %p299
      %p301 = scmp.ne.s32.totalorder %s287, %s288
      %p302 = scmp.eq.s32.totalorder %s35, 1
      %p303 = por %p301, %p302
      %p305 = scmp.ne.s32.totalorder %s288, %s304
      %p306 = scmp.eq.s32.totalorder %s35, 0
      %p307 = por %p305, %p306
      %s308 = ssub.s32 %s29, %s36
      %p309 = scmp.eq.s32.totalorder %s308, 0
      %s311 = sadd.s32 %s310, 1
      %s312 = scalar_select %p309, %s310, %s311
      %p315 = pneg %p309
      %p316 = scmp.eq.s32.totalorder %s29, 1
      %p317 = por %p315, %p316
      %p318 = scmp.ne.s32.totalorder %s310, %s313
      %p319 = scmp.eq.s32.totalorder %s29, 0
      %p320 = por %p318, %p319
      %p321 = scmp.ne.s32.totalorder %s310, %s313
      %p322 = scmp.eq.s32.totalorder %s34, 1
      %p323 = por %p321, %p322
      %p324 = scmp.ne.s32.totalorder %s313, %s314
      %p325 = scmp.eq.s32.totalorder %s34, 0
      %p326 = por %p324, %p325
      %p327 = scmp.ne.s32.totalorder %s313, %s314
      %p328 = scmp.eq.s32.totalorder %s35, 1
      %p329 = por %p327, %p328
      %p331 = scmp.ne.s32.totalorder %s314, %s330
      %p332 = scmp.eq.s32.totalorder %s35, 0
      %p333 = por %p331, %p332
      %s334 = ssub.s32 %s29, %s36
      %p335 = scmp.eq.s32.totalorder %s334, 0
      %s337 = sadd.s32 %s336, 1
      %s338 = scalar_select %p335, %s336, %s337
      %p341 = pneg %p335
      %p342 = scmp.eq.s32.totalorder %s29, 1
      %p343 = por %p341, %p342
      %p344 = scmp.ne.s32.totalorder %s336, %s339
      %p345 = scmp.eq.s32.totalorder %s29, 0
      %p346 = por %p344, %p345
      %p347 = scmp.ne.s32.totalorder %s336, %s339
      %p348 = scmp.eq.s32.totalorder %s34, 1
      %p349 = por %p347, %p348
      %p350 = scmp.ne.s32.totalorder %s339, %s340
      %p351 = scmp.eq.s32.totalorder %s34, 0
      %p352 = por %p350, %p351
      %p353 = scmp.ne.s32.totalorder %s339, %s340
      %p354 = scmp.eq.s32.totalorder %s35, 1
      %p355 = por %p353, %p354
      %p357 = scmp.ne.s32.totalorder %s340, %s356
      %p358 = scmp.eq.s32.totalorder %s35, 0
      %p359 = por %p357, %p358
      %s360 = ssub.s32 %s29, %s36
      %p361 = scmp.eq.s32.totalorder %s360, 0
      %s363 = sadd.s32 %s362, 1
      %s364 = scalar_select %p361, %s362, %s363
      %p367 = pneg %p361
      %p368 = scmp.eq.s32.totalorder %s29, 1
      %p369 = por %p367, %p368
      %p370 = scmp.ne.s32.totalorder %s362, %s365
      %p371 = scmp.eq.s32.totalorder %s29, 0
      %p372 = por %p370, %p371
      %p373 = scmp.ne.s32.totalorder %s362, %s365
      %p374 = scmp.eq.s32.totalorder %s34, 1
      %p375 = por %p373, %p374
      %p376 = scmp.ne.s32.totalorder %s365, %s366
      %p377 = scmp.eq.s32.totalorder %s34, 0
      %p378 = por %p376, %p377
      %p379 = scmp.ne.s32.totalorder %s365, %s366
      %p380 = scmp.eq.s32.totalorder %s35, 1
      %p381 = por %p379, %p380
      %p383 = scmp.ne.s32.totalorder %s366, %s382
      %p384 = scmp.eq.s32.totalorder %s35, 0
      %p385 = por %p383, %p384
      %s386 = ssub.s32 %s29, %s36
      %p387 = scmp.eq.s32.totalorder %s386, 0
      %s389 = sadd.s32 %s388, 1
      %s390 = scalar_select %p387, %s388, %s389
      %p393 = pneg %p387
      %p394 = scmp.eq.s32.totalorder %s29, 1
      %p395 = por %p393, %p394
      %p396 = scmp.ne.s32.totalorder %s388, %s391
      %p397 = scmp.eq.s32.totalorder %s29, 0
      %p398 = por %p396, %p397
      %p399 = scmp.ne.s32.totalorder %s388, %s391
      %p400 = scmp.eq.s32.totalorder %s34, 1
      %p401 = por %p399, %p400
      %p402 = scmp.ne.s32.totalorder %s391, %s392
      %p403 = scmp.eq.s32.totalorder %s34, 0
      %p404 = por %p402, %p403
      %p405 = scmp.ne.s32.totalorder %s391, %s392
      %p406 = scmp.eq.s32.totalorder %s35, 1
      %p407 = por %p405, %p406
      %p409 = scmp.ne.s32.totalorder %s392, %s408
      %p410 = scmp.eq.s32.totalorder %s35, 0
      %p411 = por %p409, %p410
      %s412 = ssub.s32 %s29, %s36
      %p413 = scmp.eq.s32.totalorder %s412, 0
      %s415 = sadd.s32 %s414, 1
      %s416 = scalar_select %p413, %s414, %s415
      %p419 = pneg %p413
      %p420 = scmp.eq.s32.totalorder %s29, 1
      %p421 = por %p419, %p420
      %p422 = scmp.ne.s32.totalorder %s414, %s417
      %p423 = scmp.eq.s32.totalorder %s29, 0
      %p424 = por %p422, %p423
      %p425 = scmp.ne.s32.totalorder %s414, %s417
      %p426 = scmp.eq.s32.totalorder %s34, 1
      %p427 = por %p425, %p426
      %p428 = scmp.ne.s32.totalorder %s417, %s418
      %p429 = scmp.eq.s32.totalorder %s34, 0
      %p430 = por %p428, %p429
      %p431 = scmp.ne.s32.totalorder %s417, %s418
      %p432 = scmp.eq.s32.totalorder %s35, 1
      %p433 = por %p431, %p432
      %p435 = scmp.ne.s32.totalorder %s418, %s434
      %p436 = scmp.eq.s32.totalorder %s35, 0
      %p437 = por %p435, %p436
      %s438 = ssub.s32 %s29, %s36
      %p439 = scmp.eq.s32.totalorder %s438, 0
      %s441 = sadd.s32 %s440, 1
      %s442 = scalar_select %p439, %s440, %s441
      %p445 = pneg %p439
      %p446 = scmp.eq.s32.totalorder %s29, 1
      %p447 = por %p445, %p446
      %p448 = scmp.ne.s32.totalorder %s440, %s443
      %p449 = scmp.eq.s32.totalorder %s29, 0
      %p450 = por %p448, %p449
      %p451 = scmp.ne.s32.totalorder %s440, %s443
      %p452 = scmp.eq.s32.totalorder %s34, 1
      %p453 = por %p451, %p452
      %p454 = scmp.ne.s32.totalorder %s443, %s444
      %p455 = scmp.eq.s32.totalorder %s34, 0
      %p456 = por %p454, %p455
      %p457 = scmp.ne.s32.totalorder %s443, %s444
      %p458 = scmp.eq.s32.totalorder %s35, 1
      %p459 = por %p457, %p458
      %p461 = scmp.ne.s32.totalorder %s444, %s460
      %p462 = scmp.eq.s32.totalorder %s35, 0
      %p463 = por %p461, %p462
      %s464 = ssub.s32 %s29, %s36
      %p465 = scmp.eq.s32.totalorder %s464, 0
      %s467 = sadd.s32 %s466, 1
      %s468 = scalar_select %p465, %s466, %s467
      %p471 = pneg %p465
      %p472 = scmp.eq.s32.totalorder %s29, 1
      %p473 = por %p471, %p472
      %p474 = scmp.ne.s32.totalorder %s466, %s469
      %p475 = scmp.eq.s32.totalorder %s29, 0
      %p476 = por %p474, %p475
      %p477 = scmp.ne.s32.totalorder %s466, %s469
      %p478 = scmp.eq.s32.totalorder %s34, 1
      %p479 = por %p477, %p478
      %p480 = scmp.ne.s32.totalorder %s469, %s470
      %p481 = scmp.eq.s32.totalorder %s34, 0
      %p482 = por %p480, %p481
      %p483 = scmp.ne.s32.totalorder %s469, %s470
      %p484 = scmp.eq.s32.totalorder %s35, 1
      %p485 = por %p483, %p484
      %p487 = scmp.ne.s32.totalorder %s470, %s486
      %p488 = scmp.eq.s32.totalorder %s35, 0
      %p489 = por %p487, %p488
      %s490 = ssub.s32 %s29, %s36
      %p491 = scmp.eq.s32.totalorder %s490, 0
      %s493 = sadd.s32 %s492, 1
      %s494 = scalar_select %p491, %s492, %s493
      %p497 = pneg %p491
      %p498 = scmp.eq.s32.totalorder %s29, 1
      %p499 = por %p497, %p498
      %p500 = scmp.ne.s32.totalorder %s492, %s495
      %p501 = scmp.eq.s32.totalorder %s29, 0
      %p502 = por %p500, %p501
      %p503 = scmp.ne.s32.totalorder %s492, %s495
      %p504 = scmp.eq.s32.totalorder %s34, 1
      %p505 = por %p503, %p504
      %p506 = scmp.ne.s32.totalorder %s495, %s496
      %p507 = scmp.eq.s32.totalorder %s34, 0
      %p508 = por %p506, %p507
      %p509 = scmp.ne.s32.totalorder %s495, %s496
      %p510 = scmp.eq.s32.totalorder %s35, 1
      %p511 = por %p509, %p510
      %p513 = scmp.ne.s32.totalorder %s496, %s512
      %p514 = scmp.eq.s32.totalorder %s35, 0
      %p515 = por %p513, %p514
      %s517 = sadd.s32 %s516, 1
      %p520 = scmp.eq.s32.totalorder %s29, 1
      %p521 = scmp.ne.s32.totalorder %s516, %s518
      %p522 = scmp.eq.s32.totalorder %s29, 0
      %p523 = por %p521, %p522
      %p524 = scmp.ne.s32.totalorder %s516, %s518
      %p525 = scmp.eq.s32.totalorder %s34, 1
      %p526 = por %p524, %p525
      %p527 = scmp.ne.s32.totalorder %s518, %s519
      %p528 = scmp.eq.s32.totalorder %s34, 0
      %p529 = por %p527, %p528
      %p530 = scmp.ne.s32.totalorder %s518, %s519
      %p531 = scmp.eq.s32.totalorder %s35, 1
      %p532 = por %p530, %p531
      %p534 = scmp.ne.s32.totalorder %s519, %s533
      %p535 = scmp.eq.s32.totalorder %s35, 0
      %p536 = por %p534, %p535
      %s538 = sadd.s32 %s537, 1
      %p541 = scmp.eq.s32.totalorder %s29, 1
      %p542 = scmp.ne.s32.totalorder %s537, %s539
      %p543 = scmp.eq.s32.totalorder %s29, 0
      %p544 = por %p542, %p543
      %p545 = scmp.ne.s32.totalorder %s537, %s539
      %p546 = scmp.eq.s32.totalorder %s34, 1
      %p547 = por %p545, %p546
      %p548 = scmp.ne.s32.totalorder %s539, %s540
      %p549 = scmp.eq.s32.totalorder %s34, 0
      %p550 = por %p548, %p549
      %p551 = scmp.ne.s32.totalorder %s539, %s540
      %p552 = scmp.eq.s32.totalorder %s35, 1
      %p553 = por %p551, %p552
      %p555 = scmp.ne.s32.totalorder %s540, %s554
      %p556 = scmp.eq.s32.totalorder %s35, 0
      %p557 = por %p555, %p556
      %s559 = sadd.s32 %s558, 1
      %p562 = scmp.eq.s32.totalorder %s29, 1
      %p563 = scmp.ne.s32.totalorder %s558, %s560
      %p564 = scmp.eq.s32.totalorder %s29, 0
      %p565 = por %p563, %p564
      %p566 = scmp.ne.s32.totalorder %s558, %s560
      %p567 = scmp.eq.s32.totalorder %s34, 1
      %p568 = por %p566, %p567
      %p569 = scmp.ne.s32.totalorder %s560, %s561
      %p570 = scmp.eq.s32.totalorder %s34, 0
      %p571 = por %p569, %p570
      %p572 = scmp.ne.s32.totalorder %s560, %s561
      %p573 = scmp.eq.s32.totalorder %s35, 1
      %p574 = por %p572, %p573
      %p576 = scmp.ne.s32.totalorder %s561, %s575
      %p577 = scmp.eq.s32.totalorder %s35, 0
      %p578 = por %p576, %p577
      %s580 = sadd.s32 %s579, 1
      %p583 = scmp.eq.s32.totalorder %s29, 1
      %p584 = scmp.ne.s32.totalorder %s579, %s581
      %p585 = scmp.eq.s32.totalorder %s29, 0
      %p586 = por %p584, %p585
      %p587 = scmp.ne.s32.totalorder %s579, %s581
      %p588 = scmp.eq.s32.totalorder %s34, 1
      %p589 = por %p587, %p588
      %p590 = scmp.ne.s32.totalorder %s581, %s582
      %p591 = scmp.eq.s32.totalorder %s34, 0
      %p592 = por %p590, %p591
      %p593 = scmp.ne.s32.totalorder %s581, %s582
      %p594 = scmp.eq.s32.totalorder %s35, 1
      %p595 = por %p593, %p594
      %p597 = scmp.ne.s32.totalorder %s582, %s596
      %p598 = scmp.eq.s32.totalorder %s35, 0
      %p599 = por %p597, %p598
      %p600 = scmp.le.s32.totalorder 1, %s29
      %p601 = scmp.lt.s32.totalorder %s29, 3
      %p602 = pnand %p600, %p601
      %p603 = pneg %p602
      // Predicated region
      $region9: #{bert_classifier_forward.1} parent=5 // pred_check
        _
      $region10: #{bert_classifier_forward.1} parent=5 // pred_check_branch
        %605 = sbr.rel (%p602) target = $region12
      $region11: #{bert_classifier_forward.1} parent=5 // pred_region
        %s606 = ssub.s32 %s29, 1
        // Predicated region
        $region13: #{bert_classifier_forward.1} parent=11 // pred_check
          %p607 = pneg %p50
        $region14: #{bert_classifier_forward.1} parent=11 // pred_check_branch
          %609 = sbr.rel (%p607) target = $region16
        $region15: #{bert_classifier_forward.1} parent=11 // pred_region
          _
        $region16: #{bert_classifier_forward.1} parent=11 // pred_fallthru
          _
        // Predicated region
        $region17: #{bert_classifier_forward.1} parent=11 // pred_check
          %p610 = pneg %p71
        $region18: #{bert_classifier_forward.1} parent=11 // pred_check_branch
          %612 = sbr.rel (%p610) target = $region20
        $region19: #{bert_classifier_forward.1} parent=11 // pred_region
          _
        $region20: #{bert_classifier_forward.1} parent=11 // pred_fallthru
          _
        // Predicated region
        $region21: #{bert_classifier_forward.1} parent=11 // pred_check
          %p613 = pneg %p92
        $region22: #{bert_classifier_forward.1} parent=11 // pred_check_branch
          %615 = sbr.rel (%p613) target = $region24
        $region23: #{bert_classifier_forward.1} parent=11 // pred_region
          _
        $region24: #{bert_classifier_forward.1} parent=11 // pred_fallthru
          _
        // Predicated region
        $region25: #{bert_classifier_forward.1} parent=11 // pred_check
          %p616 = pneg %p529
        $region26: #{bert_classifier_forward.1} parent=11 // pred_check_branch
          %618 = sbr.rel (%p616) target = $region28
        $region27: #{bert_classifier_forward.1} parent=11 // pred_region
          _
        $region28: #{bert_classifier_forward.1} parent=11 // pred_fallthru
          _
        // Predicated region
        $region29: #{bert_classifier_forward.1} parent=11 // pred_check
          %p619 = pneg %p550
        $region30: #{bert_classifier_forward.1} parent=11 // pred_check_branch
          %621 = sbr.rel (%p619) target = $region32
        $region31: #{bert_classifier_forward.1} parent=11 // pred_region
          _
        $region32: #{bert_classifier_forward.1} parent=11 // pred_fallthru
          _
        // Predicated region
        $region33: #{bert_classifier_forward.1} parent=11 // pred_check
          %p622 = pneg %p571
        $region34: #{bert_classifier_forward.1} parent=11 // pred_check_branch
          %624 = sbr.rel (%p622) target = $region36
        $region35: #{bert_classifier_forward.1} parent=11 // pred_region
          _
        $region36: #{bert_classifier_forward.1} parent=11 // pred_fallthru
          _
      $region12: #{bert_classifier_forward.1} parent=5 // pred_fallthru
        _
      %p625 = scmp.lt.s32.totalorder %s29, 2
      // Predicated region
      $region37: #{bert_classifier_forward.1} parent=5 // pred_check
        %p626 = pneg %p625
      $region38: #{bert_classifier_forward.1} parent=5 // pred_check_branch
        %628 = sbr.rel (%p626) target = $region40
      $region39: #{bert_classifier_forward.1} parent=5 // pred_region
        // Predicated region
        $region41: #{bert_classifier_forward.1} parent=39 // pred_check
          %p629 = pneg %p112
        $region42: #{bert_classifier_forward.1} parent=39 // pred_check_branch
          %631 = sbr.rel (%p629) target = $region44
        $region43: #{bert_classifier_forward.1} parent=39 // pred_region
          %p632 = scmp.lt.s32.totalorder %s29, 1
          %s633 = scalar_select %p632, %s29, 1
          %s634 = smul.addr %s633, 4
          %s635 = smul.addr %s634, 4
          %s636 = scalar_lea.vmem %s3, %s635
        $region44: #{bert_classifier_forward.1} parent=39 // pred_fallthru
          _
        // Predicated region
        $region45: #{bert_classifier_forward.1} parent=39 // pred_check
          %p637 = pneg %p138
        $region46: #{bert_classifier_forward.1} parent=39 // pred_check_branch
          %639 = sbr.rel (%p637) target = $region48
        $region47: #{bert_classifier_forward.1} parent=39 // pred_region
          %p640 = scmp.lt.s32.totalorder %s29, 1
          %s641 = scalar_select %p640, %s29, 1
          %s642 = scalar_lea.vmem %s4, %s641
        $region48: #{bert_classifier_forward.1} parent=39 // pred_fallthru
          _
        // Predicated region
        $region49: #{bert_classifier_forward.1} parent=39 // pred_check
          %p643 = pneg %p164
        $region50: #{bert_classifier_forward.1} parent=39 // pred_check_branch
          %645 = sbr.rel (%p643) target = $region52
        $region51: #{bert_classifier_forward.1} parent=39 // pred_region
          %p646 = scmp.lt.s32.totalorder %s29, 1
          %s647 = scalar_select %p646, %s29, 1
          %s648 = smul.addr %s647, 4
          %s649 = smul.addr %s648, 4
          %s650 = scalar_lea.vmem %s5, %s649
        $region52: #{bert_classifier_forward.1} parent=39 // pred_fallthru
          _
        // Predicated region
        $region53: #{bert_classifier_forward.1} parent=39 // pred_check
          %p651 = pneg %p190
        $region54: #{bert_classifier_forward.1} parent=39 // pred_check_branch
          %653 = sbr.rel (%p651) target = $region56
        $region55: #{bert_classifier_forward.1} parent=39 // pred_region
          %p654 = scmp.lt.s32.totalorder %s29, 1
          %s655 = scalar_select %p654, %s29, 1
          %s656 = scalar_lea.vmem %s6, %s655
        $region56: #{bert_classifier_forward.1} parent=39 // pred_fallthru
          _
        // Predicated region
        $region57: #{bert_classifier_forward.1} parent=39 // pred_check
          %p657 = pneg %p216
        $region58: #{bert_classifier_forward.1} parent=39 // pred_check_branch
          %659 = sbr.rel (%p657) target = $region60
        $region59: #{bert_classifier_forward.1} parent=39 // pred_region
          %p660 = scmp.lt.s32.totalorder %s29, 1
          %s661 = scalar_select %p660, %s29, 1
          %s662 = smul.addr %s661, 4
          %s663 = smul.addr %s662, 4
          %s664 = scalar_lea.vmem %s7, %s663
        $region60: #{bert_classifier_forward.1} parent=39 // pred_fallthru
          _
        // Predicated region
        $region61: #{bert_classifier_forward.1} parent=39 // pred_check
          %p665 = pneg %p242
        $region62: #{bert_classifier_forward.1} parent=39 // pred_check_branch
          %667 = sbr.rel (%p665) target = $region64
        $region63: #{bert_classifier_forward.1} parent=39 // pred_region
          %p668 = scmp.lt.s32.totalorder %s29, 1
          %s669 = scalar_select %p668, %s29, 1
          %s670 = scalar_lea.vmem %s8, %s669
        $region64: #{bert_classifier_forward.1} parent=39 // pred_fallthru
          _
        // Predicated region
        $region65: #{bert_classifier_forward.1} parent=39 // pred_check
          %p671 = pneg %p268
        $region66: #{bert_classifier_forward.1} parent=39 // pred_check_branch
          %673 = sbr.rel (%p671) target = $region68
        $region67: #{bert_classifier_forward.1} parent=39 // pred_region
          %p674 = scmp.lt.s32.totalorder %s29, 1
          %s675 = scalar_select %p674, %s29, 1
          %s676 = smul.addr %s675, 4
          %s677 = smul.addr %s676, 4
          %s678 = scalar_lea.vmem %s9, %s677
        $region68: #{bert_classifier_forward.1} parent=39 // pred_fallthru
          _
        // Predicated region
        $region69: #{bert_classifier_forward.1} parent=39 // pred_check
          %p679 = pneg %p294
        $region70: #{bert_classifier_forward.1} parent=39 // pred_check_branch
          %681 = sbr.rel (%p679) target = $region72
        $region71: #{bert_classifier_forward.1} parent=39 // pred_region
          %p682 = scmp.lt.s32.totalorder %s29, 1
          %s683 = scalar_select %p682, %s29, 1
          %s684 = scalar_lea.vmem %s10, %s683
        $region72: #{bert_classifier_forward.1} parent=39 // pred_fallthru
          _
        // Predicated region
        $region73: #{bert_classifier_forward.1} parent=39 // pred_check
          %p685 = pneg %p320
        $region74: #{bert_classifier_forward.1} parent=39 // pred_check_branch
          %687 = sbr.rel (%p685) target = $region76
        $region75: #{bert_classifier_forward.1} parent=39 // pred_region
          %p688 = scmp.lt.s32.totalorder %s29, 1
          %s689 = scalar_select %p688, %s29, 1
          %s690 = scalar_lea.vmem %s11, %s689
        $region76: #{bert_classifier_forward.1} parent=39 // pred_fallthru
          _
        // Predicated region
        $region77: #{bert_classifier_forward.1} parent=39 // pred_check
          %p691 = pneg %p346
        $region78: #{bert_classifier_forward.1} parent=39 // pred_check_branch
          %693 = sbr.rel (%p691) target = $region80
        $region79: #{bert_classifier_forward.1} parent=39 // pred_region
          %p694 = scmp.lt.s32.totalorder %s29, 1
          %s695 = scalar_select %p694, %s29, 1
          %s696 = scalar_lea.vmem %s12, %s695
        $region80: #{bert_classifier_forward.1} parent=39 // pred_fallthru
          _
        // Predicated region
        $region81: #{bert_classifier_forward.1} parent=39 // pred_check
          %p697 = pneg %p372
        $region82: #{bert_classifier_forward.1} parent=39 // pred_check_branch
          %699 = sbr.rel (%p697) target = $region84
        $region83: #{bert_classifier_forward.1} parent=39 // pred_region
          %p700 = scmp.lt.s32.totalorder %s29, 1
          %s701 = scalar_select %p700, %s29, 1
          %s702 = scalar_lea.vmem %s13, %s701
        $region84: #{bert_classifier_forward.1} parent=39 // pred_fallthru
          _
        // Predicated region
        $region85: #{bert_classifier_forward.1} parent=39 // pred_check
          %p703 = pneg %p398
        $region86: #{bert_classifier_forward.1} parent=39 // pred_check_branch
          %705 = sbr.rel (%p703) target = $region88
        $region87: #{bert_classifier_forward.1} parent=39 // pred_region
          %p706 = scmp.lt.s32.totalorder %s29, 1
          %s707 = scalar_select %p706, %s29, 1
          %s708 = scalar_lea.vmem %s14, %s707
        $region88: #{bert_classifier_forward.1} parent=39 // pred_fallthru
          _
        // Predicated region
        $region89: #{bert_classifier_forward.1} parent=39 // pred_check
          %p709 = pneg %p424
        $region90: #{bert_classifier_forward.1} parent=39 // pred_check_branch
          %711 = sbr.rel (%p709) target = $region92
        $region91: #{bert_classifier_forward.1} parent=39 // pred_region
          %p712 = scmp.lt.s32.totalorder %s29, 1
          %s713 = scalar_select %p712, %s29, 1
          %s714 = smul.addr %s713, 4
          %s715 = smul.addr %s714, 4
          %s716 = scalar_lea.vmem %s15, %s715
        $region92: #{bert_classifier_forward.1} parent=39 // pred_fallthru
          _
        // Predicated region
        $region93: #{bert_classifier_forward.1} parent=39 // pred_check
          %p717 = pneg %p450
        $region94: #{bert_classifier_forward.1} parent=39 // pred_check_branch
          %719 = sbr.rel (%p717) target = $region96
        $region95: #{bert_classifier_forward.1} parent=39 // pred_region
          %p720 = scmp.lt.s32.totalorder %s29, 1
          %s721 = scalar_select %p720, %s29, 1
          %s722 = scalar_lea.vmem %s16, %s721
        $region96: #{bert_classifier_forward.1} parent=39 // pred_fallthru
          _
        // Predicated region
        $region97: #{bert_classifier_forward.1} parent=39 // pred_check
          %p723 = pneg %p476
        $region98: #{bert_classifier_forward.1} parent=39 // pred_check_branch
          %725 = sbr.rel (%p723) target = $region100
        $region99: #{bert_classifier_forward.1} parent=39 // pred_region
          %p726 = scmp.lt.s32.totalorder %s29, 1
          %s727 = scalar_select %p726, %s29, 1
          %s728 = smul.addr %s727, 16
          %s729 = smul.addr %s728, 4
          %s730 = scalar_lea.vmem %s17, %s729
        $region100: #{bert_classifier_forward.1} parent=39 // pred_fallthru
          _
        // Predicated region
        $region101: #{bert_classifier_forward.1} parent=39 // pred_check
          %p731 = pneg %p502
        $region102: #{bert_classifier_forward.1} parent=39 // pred_check_branch
          %733 = sbr.rel (%p731) target = $region104
        $region103: #{bert_classifier_forward.1} parent=39 // pred_region
          %p734 = scmp.lt.s32.totalorder %s29, 1
          %s735 = scalar_select %p734, %s29, 1
          %s736 = scalar_lea.vmem %s18, %s735
        $region104: #{bert_classifier_forward.1} parent=39 // pred_fallthru
          _
      $region40: #{bert_classifier_forward.1} parent=5 // pred_fallthru
        _
      %p737 = scmp.le.s32.totalorder 1, %s29
      %p738 = scmp.lt.s32.totalorder %s29, 3
      %p739 = pnand %p737, %p738
      %p740 = pneg %p739
      // Predicated region
      $region105: #{bert_classifier_forward.1} parent=5 // pred_check
        _
      $region106: #{bert_classifier_forward.1} parent=5 // pred_check_branch
        %742 = sbr.rel (%p739) target = $region108
      $region107: #{bert_classifier_forward.1} parent=5 // pred_region
        %s743 = ssub.s32 %s29, 1
        %p744 = pneg %p50
        %p745 = pneg %p47
        %p746 = pneg %p71
        %p747 = pneg %p68
        %p748 = pneg %p92
        %p749 = pneg %p89
        %p750 = scmp.lt.s32.totalorder %s34, 1
        %s751 = scalar_select %p750, %s34, 1
        %s752 = smul.addr %s751, 4
        %s753 = smul.addr %s752, 4
        %s754 = scalar_lea.vmem %s3, %s753
        %p755 = pneg %p118
        %p756 = pneg %p115
        %p757 = scmp.lt.s32.totalorder %s34, 1
        %s758 = scalar_select %p757, %s34, 1
        %s759 = scalar_lea.vmem %s4, %s758
        %p760 = pneg %p144
        %p761 = pneg %p141
        %p762 = scmp.lt.s32.totalorder %s34, 1
        %s763 = scalar_select %p762, %s34, 1
        %s764 = smul.addr %s763, 4
        %s765 = smul.addr %s764, 4
        %s766 = scalar_lea.vmem %s5, %s765
        %p767 = pneg %p170
        %p768 = pneg %p167
        %p769 = scmp.lt.s32.totalorder %s34, 1
        %s770 = scalar_select %p769, %s34, 1
        %s771 = scalar_lea.vmem %s6, %s770
        %p772 = pneg %p196
        %p773 = pneg %p193
        %p774 = scmp.lt.s32.totalorder %s34, 1
        %s775 = scalar_select %p774, %s34, 1
        %s776 = smul.addr %s775, 4
        %s777 = smul.addr %s776, 4
        %s778 = scalar_lea.vmem %s7, %s777
        %p779 = pneg %p222
        %p780 = pneg %p219
        %p781 = scmp.lt.s32.totalorder %s34, 1
        %s782 = scalar_select %p781, %s34, 1
        %s783 = scalar_lea.vmem %s8, %s782
        %p784 = pneg %p248
        %p785 = pneg %p245
        %p786 = scmp.lt.s32.totalorder %s34, 1
        %s787 = scalar_select %p786, %s34, 1
        %s788 = smul.addr %s787, 4
        %s789 = smul.addr %s788, 4
        %s790 = scalar_lea.vmem %s9, %s789
        %p791 = pneg %p274
        %p792 = pneg %p271
        %p793 = scmp.lt.s32.totalorder %s34, 1
        %s794 = scalar_select %p793, %s34, 1
        %s795 = scalar_lea.vmem %s10, %s794
        %p796 = pneg %p300
        %p797 = pneg %p297
        %p798 = scmp.lt.s32.totalorder %s34, 1
        %s799 = scalar_select %p798, %s34, 1
        %s800 = scalar_lea.vmem %s11, %s799
        %p801 = pneg %p326
        %p802 = pneg %p323
        %p803 = scmp.lt.s32.totalorder %s34, 1
        %s804 = scalar_select %p803, %s34, 1
        %s805 = scalar_lea.vmem %s12, %s804
        %p806 = pneg %p352
        %p807 = pneg %p349
        %p808 = scmp.lt.s32.totalorder %s34, 1
        %s809 = scalar_select %p808, %s34, 1
        %s810 = scalar_lea.vmem %s13, %s809
        %p811 = pneg %p378
        %p812 = pneg %p375
        %p813 = scmp.lt.s32.totalorder %s34, 1
        %s814 = scalar_select %p813, %s34, 1
        %s815 = scalar_lea.vmem %s14, %s814
        %p816 = pneg %p404
        %p817 = pneg %p401
        %p818 = scmp.lt.s32.totalorder %s34, 1
        %s819 = scalar_select %p818, %s34, 1
        %s820 = smul.addr %s819, 4
        %s821 = smul.addr %s820, 4
        %s822 = scalar_lea.vmem %s15, %s821
        %p823 = pneg %p430
        %p824 = pneg %p427
        %p825 = scmp.lt.s32.totalorder %s34, 1
        %s826 = scalar_select %p825, %s34, 1
        %s827 = scalar_lea.vmem %s16, %s826
        %p828 = pneg %p456
        %p829 = pneg %p453
        %p830 = scmp.lt.s32.totalorder %s34, 1
        %s831 = scalar_select %p830, %s34, 1
        %s832 = smul.addr %s831, 16
        %s833 = smul.addr %s832, 4
        %s834 = scalar_lea.vmem %s17, %s833
        %p835 = pneg %p482
        %p836 = pneg %p479
        %p837 = scmp.lt.s32.totalorder %s34, 1
        %s838 = scalar_select %p837, %s34, 1
        %s839 = scalar_lea.vmem %s18, %s838
        %p840 = pneg %p508
        %p841 = pneg %p505
        %p842 = pneg %p529
        %p843 = pneg %p526
        %p844 = pneg %p550
        %p845 = pneg %p547
        %p846 = pneg %p571
        %p847 = pneg %p568
        %p848 = pneg %p592
        %p849 = pneg %p589
        %p850 = scmp.lt.s32.totalorder %s34, 1
        %s851 = scalar_select %p850, %s34, 1
        %s852 = smul.addr %s851, 4
        %s853 = smul.addr %s852, 4
        %s854 = scalar_lea.vmem %s3, %s853
        %p855 = scmp.lt.s32.totalorder %s34, 1
        %s856 = scalar_select %p855, %s34, 1
        %s857 = scalar_lea.vmem %s4, %s856
        %p858 = scmp.lt.s32.totalorder %s34, 1
        %s859 = scalar_select %p858, %s34, 1
        %s860 = smul.addr %s859, 4
        %s861 = smul.addr %s860, 4
        %s862 = scalar_lea.vmem %s5, %s861
        %p863 = scmp.lt.s32.totalorder %s34, 1
        %s864 = scalar_select %p863, %s34, 1
        %s865 = scalar_lea.vmem %s6, %s864
        %p866 = scmp.lt.s32.totalorder %s34, 1
        %s867 = scalar_select %p866, %s34, 1
        %s868 = smul.addr %s867, 4
        %s869 = smul.addr %s868, 4
        %s870 = scalar_lea.vmem %s7, %s869
        %p871 = scmp.lt.s32.totalorder %s34, 1
        %s872 = scalar_select %p871, %s34, 1
        %s873 = scalar_lea.vmem %s8, %s872
        %p874 = scmp.lt.s32.totalorder %s34, 1
        %s875 = scalar_select %p874, %s34, 1
        %s876 = smul.addr %s875, 4
        %s877 = smul.addr %s876, 4
        %s878 = scalar_lea.vmem %s9, %s877
        %p879 = scmp.lt.s32.totalorder %s34, 1
        %s880 = scalar_select %p879, %s34, 1
        %s881 = scalar_lea.vmem %s10, %s880
        %p882 = scmp.lt.s32.totalorder %s34, 1
        %s883 = scalar_select %p882, %s34, 1
        %s884 = scalar_lea.vmem %s11, %s883
        %p885 = scmp.lt.s32.totalorder %s34, 1
        %s886 = scalar_select %p885, %s34, 1
        %s887 = scalar_lea.vmem %s12, %s886
        %p888 = scmp.lt.s32.totalorder %s34, 1
        %s889 = scalar_select %p888, %s34, 1
        %s890 = scalar_lea.vmem %s13, %s889
        %p891 = scmp.lt.s32.totalorder %s34, 1
        %s892 = scalar_select %p891, %s34, 1
        %s893 = scalar_lea.vmem %s14, %s892
        %p894 = scmp.lt.s32.totalorder %s34, 1
        %s895 = scalar_select %p894, %s34, 1
        %s896 = smul.addr %s895, 4
        %s897 = smul.addr %s896, 4
        %s898 = scalar_lea.vmem %s15, %s897
        %p899 = scmp.lt.s32.totalorder %s34, 1
        %s900 = scalar_select %p899, %s34, 1
        %s901 = scalar_lea.vmem %s16, %s900
        %p902 = scmp.lt.s32.totalorder %s34, 1
        %s903 = scalar_select %p902, %s34, 1
        %s904 = smul.addr %s903, 16
        %s905 = smul.addr %s904, 4
        %s906 = scalar_lea.vmem %s17, %s905
        %p907 = scmp.lt.s32.totalorder %s34, 1
        %s908 = scalar_select %p907, %s34, 1
        %s909 = scalar_lea.vmem %s18, %s908
        %p911 = scmp.eq.s32.totalorder %s34, 0
        // Predicated region
        $region109: #{bert_classifier_forward.1} parent=107 // pred_check
          %p912 = pneg %p911
        $region110: #{bert_classifier_forward.1} parent=107 // pred_check_branch
          %914 = sbr.rel (%p912) target = $region112
        $region111: #{bert_classifier_forward.1} parent=107 // pred_region
          %v915 = vld [vmem:[%s0] sm:$0xff]
          %v916 = vld [vmem:[%s0 + $0x8] sm:$0xff]
          %vm917 = vcmask 261120
          %918 = vst.msk [vmem:[#allocation2] sm:$0xff] %vm917, %v915
          %919 = vst.msk [vmem:[#allocation2 + $0x8] sm:$0xff] %vm917, %v916
          %vm920 = vcmask 17408
          %921 = vst.msk [vmem:[#allocation3] sm:$0x3] %vm920, 0.0
        $region112: #{bert_classifier_forward.1} parent=107 // pred_fallthru
          _
        %v922 = vld [vmem:[#allocation2] sm:$0xff]
        %v923 = vld [vmem:[#allocation2 + $0x8] sm:$0xff]
        %v924 = vld [vmem:[%s1] sm:$0x3]
        %v925 = vld [vmem:[%s884] sm:$0x1]
        %v926 = vld [vmem:[%s887] sm:$0x1]
        %vm927 = vcmask 261120
        %v928 = vsel %vm927, %v922, 0.0
        %929 = vadd.xlane.f32.xlu0 %v928
        %v930 = vpop.xlane.xlu0 %929
        %v931 = vsel %vm927, %v923, 0.0
        %932 = vadd.xlane.f32.xlu0 %v931
        %v933 = vpop.xlane.xlu0 %932
        %v934 = vrcp.pop 32.0
        %v935 = vmul.f32 %v930, %v934
        %v936 = vmul.f32 %v933, %v934
        %v937 = vsub.f32 %v922, %v935
        %v938 = vsub.f32 %v923, %v936
        %v939 = vmul.f32 %v937, %v937
        %v940 = vmul.f32 %v938, %v938
        %v941 = vsel %vm927, %v939, 0.0
        %942 = vadd.xlane.f32.xlu0 %v941
        %v943 = vpop.xlane.xlu0 %942
        %v944 = vsel %vm927, %v940, 0.0
        %945 = vadd.xlane.f32.xlu0 %v944
        %v946 = vpop.xlane.xlu0 %945
        %v947 = vmul.f32 %v943, %v934
        %v948 = vmul.f32 %v946, %v934
        %v949 = vadd.f32 %v947, 1e-06
        %v950 = vadd.f32 %v948, 1e-06
        %v951 = vrsqrt.pop %v949
        %v952 = vrsqrt.pop %v950
        %v953 = vmul.f32 %v937, %v951
        %v954 = vmul.f32 %v938, %v952
        %v956 = vlaneseq
        %v957 = vshrl.u32 %v956, 7
        %v958 = vsub.s32 0, %v957
        %v959 = vrot.slane %v925, %v958
        %v961 = vmul.f32 %v953, %v959
        %v962 = vmul.f32 %v954, %v959
        %v964 = vlaneseq
        %v965 = vshrl.u32 %v964, 7
        %v966 = vsub.s32 0, %v965
        %v967 = vrot.slane %v926, %v966
        %v969 = vadd.f32 %v961, %v967
        %v970 = vadd.f32 %v962, %v967
        %v971 = vpack.c.bf16 %v970, %v969
        %v972 = vld [vmem:[%s854] sm:$0xf]
        %v973 = vld [vmem:[%s854 + $0x4] sm:$0xf]
        %v974 = vld [vmem:[%s854 + $0x8] sm:$0xf]
        %v975 = vld [vmem:[%s854 + $0xc] sm:$0xf]
        %v976 = vld [vmem:[%s857] sm:$0x1]
        %v978 = vlaneseq
        %v979 = vshrl.u32 %v978, 7
        %v980 = vsub.s32 0, %v979
        %v981 = vrot.slane %v976, %v980
        %v987 = vunpack.c.l.b16 %v972
        %v988 = vunpack.c.l.b16 %v973
        %v989 = vunpack.c.l.b16 %v974
        %v990 = vunpack.c.l.b16 %v975
        %v991 = vpack.c.b16 %v988, %v987
        %v992 = vpack.c.b16 %v990, %v989
        %v996 = vsel %vm927, %v971, 0
        %998 = vmatprep.subr.bf16.mxu0 0
        %999 = vmatpush1.bf16.msra.mxu0 %v991
        %1000 = vmatprep.subr.bf16.mxu0 0
        %1001 = vmatpush1.bf16.msra.mxu0 %v992
        %1002 = vmatprep.subr.bf16.mxu0 0
        %1003 = vmatpush1.bf16.msra.mxu0 0
        %1004 = vmatprep.subr.bf16.mxu0 0
        %1005 = vmatpush1.bf16.msra.mxu0 0
        %1006 = vmatprep.subr.bf16.mxu0 0
        %1007 = vmatpush1.bf16.msra.mxu0 0
        %1008 = vmatprep.subr.bf16.mxu0 0
        %1009 = vmatpush1.bf16.msra.mxu0 0
        %1010 = vmatprep.subr.bf16.mxu0 0
        %1011 = vmatpush1.bf16.msra.mxu0 0
        %1012 = vmatprep.subr.bf16.mxu0 0
        %1013 = vmatpush1.bf16.msra.mxu0 0
        %1014 = vmatprep.subr.bf16.mxu0 0
        %1015 = vmatpush1.bf16.msra.mxu0 0
        %1016 = vmatprep.subr.bf16.mxu0 0
        %1017 = vmatpush1.bf16.msra.mxu0 0
        %1018 = vmatprep.subr.bf16.mxu0 0
        %1019 = vmatpush1.bf16.msra.mxu0 0
        %1020 = vmatprep.subr.bf16.mxu0 0
        %1021 = vmatpush1.bf16.msra.mxu0 0
        %1022 = vmatprep.subr.bf16.mxu0 0
        %1023 = vmatpush1.bf16.msra.mxu0 0
        %1024 = vmatprep.subr.bf16.mxu0 0
        %1025 = vmatpush1.bf16.msra.mxu0 0
        %1026 = vmatprep.subr.bf16.mxu0 0
        %1027 = vmatpush1.bf16.msra.mxu0 0
        %1028 = vmatprep.subr.bf16.mxu0 0
        %1029 = vmatpush1.bf16.msra.mxu0 0
        %1030 = vmatprep.mubr.bf16.mxu0 0
        %1031 = vmatmul.mubr.bf16.gmra.mrb[0].mxu0 %v996
        %v1032 = vpop.f32.mrb[0].mxu0
        %v1033 = vadd.f32 %v981, %v1032
        %v1034 = vpop.f32.mrb[0].mxu0
        %v1035 = vpop.f32.mrb[0].mxu0
        %v1036 = vadd.f32 %v981, %v1035
        %v1037 = vpop.f32.mrb[0].mxu0
        %1038 = vdwg.mxu0
        %v1039 = vld [vmem:[%s862] sm:$0xf]
        %v1040 = vld [vmem:[%s862 + $0x4] sm:$0xf]
        %v1041 = vld [vmem:[%s862 + $0x8] sm:$0xf]
        %v1042 = vld [vmem:[%s862 + $0xc] sm:$0xf]
        %v1043 = vld [vmem:[%s865] sm:$0x1]
        %v1045 = vlaneseq
        %v1046 = vshrl.u32 %v1045, 7
        %v1047 = vsub.s32 0, %v1046
        %v1048 = vrot.slane %v1043, %v1047
        %v1054 = vunpack.c.l.b16 %v1039
        %v1055 = vunpack.c.l.b16 %v1040
        %v1056 = vunpack.c.l.b16 %v1041
        %v1057 = vunpack.c.l.b16 %v1042
        %v1058 = vpack.c.b16 %v1055, %v1054
        %v1059 = vpack.c.b16 %v1057, %v1056
        %1062 = vmatprep.subr.bf16.mxu0 0
        %1063 = vmatpush1.bf16.msra.mxu0 %v1058
        %1064 = vmatprep.subr.bf16.mxu0 0
        %1065 = vmatpush1.bf16.msra.mxu0 %v1059
        %1066 = vmatprep.subr.bf16.mxu0 0
        %1067 = vmatpush1.bf16.msra.mxu0 0
        %1068 = vmatprep.subr.bf16.mxu0 0
        %1069 = vmatpush1.bf16.msra.mxu0 0
        %1070 = vmatprep.subr.bf16.mxu0 0
        %1071 = vmatpush1.bf16.msra.mxu0 0
        %1072 = vmatprep.subr.bf16.mxu0 0
        %1073 = vmatpush1.bf16.msra.mxu0 0
        %1074 = vmatprep.subr.bf16.mxu0 0
        %1075 = vmatpush1.bf16.msra.mxu0 0
        %1076 = vmatprep.subr.bf16.mxu0 0
        %1077 = vmatpush1.bf16.msra.mxu0 0
        %1078 = vmatprep.subr.bf16.mxu0 0
        %1079 = vmatpush1.bf16.msra.mxu0 0
        %1080 = vmatprep.subr.bf16.mxu0 0
        %1081 = vmatpush1.bf16.msra.mxu0 0
        %1082 = vmatprep.subr.bf16.mxu0 0
        %1083 = vmatpush1.bf16.msra.mxu0 0
        %1084 = vmatprep.subr.bf16.mxu0 0
        %1085 = vmatpush1.bf16.msra.mxu0 0
        %1086 = vmatprep.subr.bf16.mxu0 0
        %1087 = vmatpush1.bf16.msra.mxu0 0
        %1088 = vmatprep.subr.bf16.mxu0 0
        %1089 = vmatpush1.bf16.msra.mxu0 0
        %1090 = vmatprep.subr.bf16.mxu0 0
        %1091 = vmatpush1.bf16.msra.mxu0 0
        %1092 = vmatprep.subr.bf16.mxu0 0
        %1093 = vmatpush1.bf16.msra.mxu0 0
        %1094 = vmatprep.mubr.bf16.mxu0 0
        %1095 = vmatmul.mubr.bf16.gmra.mrb[0].mxu0 %v996
        %v1096 = vpop.f32.mrb[0].mxu0
        %v1097 = vadd.f32 %v1048, %v1096
        %v1098 = vpop.f32.mrb[0].mxu0
        %v1099 = vpop.f32.mrb[0].mxu0
        %v1100 = vadd.f32 %v1048, %v1099
        %v1101 = vpop.f32.mrb[0].mxu0
        %1102 = vdwg.mxu0
        %v1103 = vld [vmem:[%s870] sm:$0xf]
        %v1104 = vld [vmem:[%s870 + $0x4] sm:$0xf]
        %v1105 = vld [vmem:[%s870 + $0x8] sm:$0xf]
        %v1106 = vld [vmem:[%s870 + $0xc] sm:$0xf]
        %v1107 = vld [vmem:[%s873] sm:$0x1]
        %v1109 = vlaneseq
        %v1110 = vshrl.u32 %v1109, 7
        %v1111 = vsub.s32 0, %v1110
        %v1112 = vrot.slane %v1107, %v1111
        %v1118 = vunpack.c.l.b16 %v1103
        %v1119 = vunpack.c.l.b16 %v1104
        %v1120 = vunpack.c.l.b16 %v1105
        %v1121 = vunpack.c.l.b16 %v1106
        %v1122 = vpack.c.b16 %v1119, %v1118
        %v1123 = vpack.c.b16 %v1121, %v1120
        %1126 = vmatprep.subr.bf16.mxu0 0
        %1127 = vmatpush1.bf16.msra.mxu0 %v1122
        %1128 = vmatprep.subr.bf16.mxu0 0
        %1129 = vmatpush1.bf16.msra.mxu0 %v1123
        %1130 = vmatprep.subr.bf16.mxu0 0
        %1131 = vmatpush1.bf16.msra.mxu0 0
        %1132 = vmatprep.subr.bf16.mxu0 0
        %1133 = vmatpush1.bf16.msra.mxu0 0
        %1134 = vmatprep.subr.bf16.mxu0 0
        %1135 = vmatpush1.bf16.msra.mxu0 0
        %1136 = vmatprep.subr.bf16.mxu0 0
        %1137 = vmatpush1.bf16.msra.mxu0 0
        %1138 = vmatprep.subr.bf16.mxu0 0
        %1139 = vmatpush1.bf16.msra.mxu0 0
        %1140 = vmatprep.subr.bf16.mxu0 0
        %1141 = vmatpush1.bf16.msra.mxu0 0
        %1142 = vmatprep.subr.bf16.mxu0 0
        %1143 = vmatpush1.bf16.msra.mxu0 0
        %1144 = vmatprep.subr.bf16.mxu0 0
        %1145 = vmatpush1.bf16.msra.mxu0 0
        %1146 = vmatprep.subr.bf16.mxu0 0
        %1147 = vmatpush1.bf16.msra.mxu0 0
        %1148 = vmatprep.subr.bf16.mxu0 0
        %1149 = vmatpush1.bf16.msra.mxu0 0
        %1150 = vmatprep.subr.bf16.mxu0 0
        %1151 = vmatpush1.bf16.msra.mxu0 0
        %1152 = vmatprep.subr.bf16.mxu0 0
        %1153 = vmatpush1.bf16.msra.mxu0 0
        %1154 = vmatprep.subr.bf16.mxu0 0
        %1155 = vmatpush1.bf16.msra.mxu0 0
        %1156 = vmatprep.subr.bf16.mxu0 0
        %1157 = vmatpush1.bf16.msra.mxu0 0
        %1158 = vmatprep.mubr.bf16.mxu0 0
        %1159 = vmatmul.mubr.bf16.gmra.mrb[0].mxu0 %v996
        %v1160 = vpop.f32.mrb[0].mxu0
        %v1161 = vadd.f32 %v1112, %v1160
        %v1162 = vpop.f32.mrb[0].mxu0
        %v1163 = vpop.f32.mrb[0].mxu0
        %v1164 = vadd.f32 %v1112, %v1163
        %v1165 = vpop.f32.mrb[0].mxu0
        %1166 = vdwg.mxu0
        %vm1167 = vcmask 130048
        %v1169 = vsel %vm1167, %v1033, 0
        %v1172 = vsel %vm1167, %v1097, 0
        %1174 = vmatprep.subr.mxu0 0.0
        %1175 = vmatpush1.xpose.msra.mxu0 %v1172
        %1176 = vmatprep.subr.mxu0 0.0
        %1177 = vmatpush1.xpose.msra.mxu0 0.0
        %1178 = vmatprep.subr.mxu0 0.0
        %1179 = vmatpush1.xpose.msra.mxu0 0.0
        %1180 = vmatprep.subr.mxu0 0.0
        %1181 = vmatpush1.xpose.msra.mxu0 0.0
        %1182 = vmatprep.subr.mxu0 0.0
        %1183 = vmatpush1.xpose.msra.mxu0 0.0
        %1184 = vmatprep.subr.mxu0 0.0
        %1185 = vmatpush1.xpose.msra.mxu0 0.0
        %1186 = vmatprep.subr.mxu0 0.0
        %1187 = vmatpush1.xpose.msra.mxu0 0.0
        %1188 = vmatprep.subr.mxu0 0.0
        %1189 = vmatpush1.xpose.msra.mxu0 0.0
        %1190 = vmatprep.subr.mxu0 0.0
        %1191 = vmatpush1.xpose.msra.mxu0 0.0
        %1192 = vmatprep.subr.mxu0 0.0
        %1193 = vmatpush1.xpose.msra.mxu0 0.0
        %1194 = vmatprep.subr.mxu0 0.0
        %1195 = vmatpush1.xpose.msra.mxu0 0.0
        %1196 = vmatprep.subr.mxu0 0.0
        %1197 = vmatpush1.xpose.msra.mxu0 0.0
        %1198 = vmatprep.subr.mxu0 0.0
        %1199 = vmatpush1.xpose.msra.mxu0 0.0
        %1200 = vmatprep.subr.mxu0 0.0
        %1201 = vmatpush1.xpose.msra.mxu0 0.0
        %1202 = vmatprep.subr.mxu0 0.0
        %1203 = vmatpush1.xpose.msra.mxu0 0.0
        %1204 = vmatprep.subr.mxu0 0.0
        %1205 = vmatpush1.xpose.msra.mxu0 0.0
        %1206 = vmatprep.subr.mxu0 0.0
        %1207 = vmatpush1.xpose.msra.mxu0 0.0
        %1208 = vmatprep.subr.mxu0 0.0
        %1209 = vmatpush1.xpose.msra.mxu0 0.0
        %1210 = vmatprep.subr.mxu0 0.0
        %1211 = vmatpush1.xpose.msra.mxu0 0.0
        %1212 = vmatprep.subr.mxu0 0.0
        %1213 = vmatpush1.xpose.msra.mxu0 0.0
        %1214 = vmatprep.subr.mxu0 0.0
        %1215 = vmatpush1.xpose.msra.mxu0 0.0
        %1216 = vmatprep.subr.mxu0 0.0
        %1217 = vmatpush1.xpose.msra.mxu0 0.0
        %1218 = vmatprep.subr.mxu0 0.0
        %1219 = vmatpush1.xpose.msra.mxu0 0.0
        %1220 = vmatprep.subr.mxu0 0.0
        %1221 = vmatpush1.xpose.msra.mxu0 0.0
        %1222 = vmatprep.subr.mxu0 0.0
        %1223 = vmatpush1.xpose.msra.mxu0 0.0
        %1224 = vmatprep.subr.mxu0 0.0
        %1225 = vmatpush1.xpose.msra.mxu0 0.0
        %1226 = vmatprep.subr.mxu0 0.0
        %1227 = vmatpush1.xpose.msra.mxu0 0.0
        %1228 = vmatprep.subr.mxu0 0.0
        %1229 = vmatpush1.xpose.msra.mxu0 0.0
        %1230 = vmatprep.subr.mxu0 0.0
        %1231 = vmatpush1.xpose.msra.mxu0 0.0
        %1232 = vmatprep.subr.mxu0 0.0
        %1233 = vmatpush1.xpose.msra.mxu0 0.0
        %1234 = vmatprep.subr.mxu0 0.0
        %1235 = vmatpush1.xpose.msra.mxu0 0.0
        %1236 = vmatprep.subr.mxu0 0.0
        %1237 = vmatpush1.xpose.msra.mxu0 0.0
        %1238 = vmatprep.mubr.f32.mxu0 0.0
        %1239 = vmatmul.mubr.f32.gmra.mrb[0].mxu0 %v1169
        %v1240 = vpop.f32.mrb[0].mxu0
        %v1241 = vadd.f32 0.0, %v1240
        %v1242 = vpop.f32.mrb[0].mxu0
        %1243 = vdwg.mxu0
        %v1244 = vmul.f32 %v1241, 0.25
        %v1245 = vlaneseq
        %v1246 = vshrl.u32 %v1245, 7
        %v1247 = vsub.s32 0, %v1246
        %v1248 = vrot.slane %v924, %v1247
        %v1249 = vadd.f32 %v1244, %v1248
        %vm1250 = vcmask 64512
        %v1251 = vsel %vm1250, %v1249, -inf
        %1252 = vmax.xlane.f32.xlu0 %v1251
        %v1253 = vpop.xlane.xlu0 %1252
        %v1254 = vsub.f32 %v1249, %v1253
        %v1255 = vmul.f32 %v1254, 1.442695
        %v1256 = vpow.pop %v1255
        %v1257 = vsel %vm1250, %v1256, 0.0
        %1258 = vadd.xlane.f32.xlu0 %v1257
        %v1259 = vpop.xlane.xlu0 %1258
        %v1260 = vrcp.pop %v1259
        %v1261 = vmul.f32 %v1256, %v1260
        %v1263 = vsel %vm1250, %v1261, 0
        %1265 = vmatprep.subr.mxu0 0.0
        %1266 = vmatpush1.msra.mxu0 %v1161
        %1267 = vmatprep.subr.mxu0 0.0
        %1268 = vmatpush1.msra.mxu0 0.0
        %1269 = vmatprep.subr.mxu0 0.0
        %1270 = vmatpush1.msra.mxu0 0.0
        %1271 = vmatprep.subr.mxu0 0.0
        %1272 = vmatpush1.msra.mxu0 0.0
        %1273 = vmatprep.subr.mxu0 0.0
        %1274 = vmatpush1.msra.mxu0 0.0
        %1275 = vmatprep.subr.mxu0 0.0
        %1276 = vmatpush1.msra.mxu0 0.0
        %1277 = vmatprep.subr.mxu0 0.0
        %1278 = vmatpush1.msra.mxu0 0.0
        %1279 = vmatprep.subr.mxu0 0.0
        %1280 = vmatpush1.msra.mxu0 0.0
        %1281 = vmatprep.subr.mxu0 0.0
        %1282 = vmatpush1.msra.mxu0 0.0
        %1283 = vmatprep.subr.mxu0 0.0
        %1284 = vmatpush1.msra.mxu0 0.0
        %1285 = vmatprep.subr.mxu0 0.0
        %1286 = vmatpush1.msra.mxu0 0.0
        %1287 = vmatprep.subr.mxu0 0.0
        %1288 = vmatpush1.msra.mxu0 0.0
        %1289 = vmatprep.subr.mxu0 0.0
        %1290 = vmatpush1.msra.mxu0 0.0
        %1291 = vmatprep.subr.mxu0 0.0
        %1292 = vmatpush1.msra.mxu0 0.0
        %1293 = vmatprep.subr.mxu0 0.0
        %1294 = vmatpush1.msra.mxu0 0.0
        %1295 = vmatprep.subr.mxu0 0.0
        %1296 = vmatpush1.msra.mxu0 0.0
        %1297 = vmatprep.subr.mxu0 0.0
        %1298 = vmatpush1.msra.mxu0 0.0
        %1299 = vmatprep.subr.mxu0 0.0
        %1300 = vmatpush1.msra.mxu0 0.0
        %1301 = vmatprep.subr.mxu0 0.0
        %1302 = vmatpush1.msra.mxu0 0.0
        %1303 = vmatprep.subr.mxu0 0.0
        %1304 = vmatpush1.msra.mxu0 0.0
        %1305 = vmatprep.subr.mxu0 0.0
        %1306 = vmatpush1.msra.mxu0 0.0
        %1307 = vmatprep.subr.mxu0 0.0
        %1308 = vmatpush1.msra.mxu0 0.0
        %1309 = vmatprep.subr.mxu0 0.0
        %1310 = vmatpush1.msra.mxu0 0.0
        %1311 = vmatprep.subr.mxu0 0.0
        %1312 = vmatpush1.msra.mxu0 0.0
        %1313 = vmatprep.subr.mxu0 0.0
        %1314 = vmatpush1.msra.mxu0 0.0
        %1315 = vmatprep.subr.mxu0 0.0
        %1316 = vmatpush1.msra.mxu0 0.0
        %1317 = vmatprep.subr.mxu0 0.0
        %1318 = vmatpush1.msra.mxu0 0.0
        %1319 = vmatprep.subr.mxu0 0.0
        %1320 = vmatpush1.msra.mxu0 0.0
        %1321 = vmatprep.subr.mxu0 0.0
        %1322 = vmatpush1.msra.mxu0 0.0
        %1323 = vmatprep.subr.mxu0 0.0
        %1324 = vmatpush1.msra.mxu0 0.0
        %1325 = vmatprep.subr.mxu0 0.0
        %1326 = vmatpush1.msra.mxu0 0.0
        %1327 = vmatprep.subr.mxu0 0.0
        %1328 = vmatpush1.msra.mxu0 0.0
        %1329 = vmatprep.mubr.f32.mxu0 0.0
        %1330 = vmatmul.mubr.f32.gmra.mrb[0].mxu0 %v1263
        %v1331 = vpop.f32.mrb[0].mxu0
        %v1332 = vadd.f32 0.0, %v1331
        %v1333 = vpop.f32.mrb[0].mxu0
        %1334 = vdwg.mxu0
        %1335 = vrot.lane.b32.xlu0 %v1033, 112
        %v1336 = vpop.permute.xlu0 %1335
        %1337 = vrot.lane.b32.xlu0 %v1097, 112
        %v1338 = vpop.permute.xlu0 %1337
        %v1339 = vsel %vm1167, %v1336, 0
        %v1341 = vsel %vm1167, %v1338, 0
        %1343 = vmatprep.subr.mxu0 0.0
        %1344 = vmatpush1.xpose.msra.mxu0 %v1341
        %1345 = vmatprep.subr.mxu0 0.0
        %1346 = vmatpush1.xpose.msra.mxu0 0.0
        %1347 = vmatprep.subr.mxu0 0.0
        %1348 = vmatpush1.xpose.msra.mxu0 0.0
        %1349 = vmatprep.subr.mxu0 0.0
        %1350 = vmatpush1.xpose.msra.mxu0 0.0
        %1351 = vmatprep.subr.mxu0 0.0
        %1352 = vmatpush1.xpose.msra.mxu0 0.0
        %1353 = vmatprep.subr.mxu0 0.0
        %1354 = vmatpush1.xpose.msra.mxu0 0.0
        %1355 = vmatprep.subr.mxu0 0.0
        %1356 = vmatpush1.xpose.msra.mxu0 0.0
        %1357 = vmatprep.subr.mxu0 0.0
        %1358 = vmatpush1.xpose.msra.mxu0 0.0
        %1359 = vmatprep.subr.mxu0 0.0
        %1360 = vmatpush1.xpose.msra.mxu0 0.0
        %1361 = vmatprep.subr.mxu0 0.0
        %1362 = vmatpush1.xpose.msra.mxu0 0.0
        %1363 = vmatprep.subr.mxu0 0.0
        %1364 = vmatpush1.xpose.msra.mxu0 0.0
        %1365 = vmatprep.subr.mxu0 0.0
        %1366 = vmatpush1.xpose.msra.mxu0 0.0
        %1367 = vmatprep.subr.mxu0 0.0
        %1368 = vmatpush1.xpose.msra.mxu0 0.0
        %1369 = vmatprep.subr.mxu0 0.0
        %1370 = vmatpush1.xpose.msra.mxu0 0.0
        %1371 = vmatprep.subr.mxu0 0.0
        %1372 = vmatpush1.xpose.msra.mxu0 0.0
        %1373 = vmatprep.subr.mxu0 0.0
        %1374 = vmatpush1.xpose.msra.mxu0 0.0
        %1375 = vmatprep.subr.mxu0 0.0
        %1376 = vmatpush1.xpose.msra.mxu0 0.0
        %1377 = vmatprep.subr.mxu0 0.0
        %1378 = vmatpush1.xpose.msra.mxu0 0.0
        %1379 = vmatprep.subr.mxu0 0.0
        %1380 = vmatpush1.xpose.msra.mxu0 0.0
        %1381 = vmatprep.subr.mxu0 0.0
        %1382 = vmatpush1.xpose.msra.mxu0 0.0
        %1383 = vmatprep.subr.mxu0 0.0
        %1384 = vmatpush1.xpose.msra.mxu0 0.0
        %1385 = vmatprep.subr.mxu0 0.0
        %1386 = vmatpush1.xpose.msra.mxu0 0.0
        %1387 = vmatprep.subr.mxu0 0.0
        %1388 = vmatpush1.xpose.msra.mxu0 0.0
        %1389 = vmatprep.subr.mxu0 0.0
        %1390 = vmatpush1.xpose.msra.mxu0 0.0
        %1391 = vmatprep.subr.mxu0 0.0
        %1392 = vmatpush1.xpose.msra.mxu0 0.0
        %1393 = vmatprep.subr.mxu0 0.0
        %1394 = vmatpush1.xpose.msra.mxu0 0.0
        %1395 = vmatprep.subr.mxu0 0.0
        %1396 = vmatpush1.xpose.msra.mxu0 0.0
        %1397 = vmatprep.subr.mxu0 0.0
        %1398 = vmatpush1.xpose.msra.mxu0 0.0
        %1399 = vmatprep.subr.mxu0 0.0
        %1400 = vmatpush1.xpose.msra.mxu0 0.0
        %1401 = vmatprep.subr.mxu0 0.0
        %1402 = vmatpush1.xpose.msra.mxu0 0.0
        %1403 = vmatprep.subr.mxu0 0.0
        %1404 = vmatpush1.xpose.msra.mxu0 0.0
        %1405 = vmatprep.subr.mxu0 0.0
        %1406 = vmatpush1.xpose.msra.mxu0 0.0
        %1407 = vmatprep.mubr.f32.mxu0 0.0
        %1408 = vmatmul.mubr.f32.gmra.mrb[0].mxu0 %v1339
        %v1409 = vpop.f32.mrb[0].mxu0
        %v1410 = vadd.f32 0.0, %v1409
        %v1411 = vpop.f32.mrb[0].mxu0
        %1412 = vdwg.mxu0
        %v1413 = vmul.f32 %v1410, 0.25
        %v1414 = vadd.f32 %v1413, %v1248
        %v1415 = vsel %vm1250, %v1414, -inf
        %1416 = vmax.xlane.f32.xlu0 %v1415
        %v1417 = vpop.xlane.xlu0 %1416
        %v1418 = vsub.f32 %v1414, %v1417
        %v1419 = vmul.f32 %v1418, 1.442695
        %v1420 = vpow.pop %v1419
        %v1421 = vsel %vm1250, %v1420, 0.0
        %1422 = vadd.xlane.f32.xlu0 %v1421
        %v1423 = vpop.xlane.xlu0 %1422
        %v1424 = vrcp.pop %v1423
        %v1425 = vmul.f32 %v1420, %v1424
        %1427 = vrot.lane.b32.xlu0 %v1161, 112
        %v1428 = vpop.permute.xlu0 %1427
        %v1431 = vsel %vm1250, %v1425, 0
        %1433 = vmatprep.subr.mxu0 0.0
        %1434 = vmatpush1.msra.mxu0 %v1428
        %1435 = vmatprep.subr.mxu0 0.0
        %1436 = vmatpush1.msra.mxu0 0.0
        %1437 = vmatprep.subr.mxu0 0.0
        %1438 = vmatpush1.msra.mxu0 0.0
        %1439 = vmatprep.subr.mxu0 0.0
        %1440 = vmatpush1.msra.mxu0 0.0
        %1441 = vmatprep.subr.mxu0 0.0
        %1442 = vmatpush1.msra.mxu0 0.0
        %1443 = vmatprep.subr.mxu0 0.0
        %1444 = vmatpush1.msra.mxu0 0.0
        %1445 = vmatprep.subr.mxu0 0.0
        %1446 = vmatpush1.msra.mxu0 0.0
        %1447 = vmatprep.subr.mxu0 0.0
        %1448 = vmatpush1.msra.mxu0 0.0
        %1449 = vmatprep.subr.mxu0 0.0
        %1450 = vmatpush1.msra.mxu0 0.0
        %1451 = vmatprep.subr.mxu0 0.0
        %1452 = vmatpush1.msra.mxu0 0.0
        %1453 = vmatprep.subr.mxu0 0.0
        %1454 = vmatpush1.msra.mxu0 0.0
        %1455 = vmatprep.subr.mxu0 0.0
        %1456 = vmatpush1.msra.mxu0 0.0
        %1457 = vmatprep.subr.mxu0 0.0
        %1458 = vmatpush1.msra.mxu0 0.0
        %1459 = vmatprep.subr.mxu0 0.0
        %1460 = vmatpush1.msra.mxu0 0.0
        %1461 = vmatprep.subr.mxu0 0.0
        %1462 = vmatpush1.msra.mxu0 0.0
        %1463 = vmatprep.subr.mxu0 0.0
        %1464 = vmatpush1.msra.mxu0 0.0
        %1465 = vmatprep.subr.mxu0 0.0
        %1466 = vmatpush1.msra.mxu0 0.0
        %1467 = vmatprep.subr.mxu0 0.0
        %1468 = vmatpush1.msra.mxu0 0.0
        %1469 = vmatprep.subr.mxu0 0.0
        %1470 = vmatpush1.msra.mxu0 0.0
        %1471 = vmatprep.subr.mxu0 0.0
        %1472 = vmatpush1.msra.mxu0 0.0
        %1473 = vmatprep.subr.mxu0 0.0
        %1474 = vmatpush1.msra.mxu0 0.0
        %1475 = vmatprep.subr.mxu0 0.0
        %1476 = vmatpush1.msra.mxu0 0.0
        %1477 = vmatprep.subr.mxu0 0.0
        %1478 = vmatpush1.msra.mxu0 0.0
        %1479 = vmatprep.subr.mxu0 0.0
        %1480 = vmatpush1.msra.mxu0 0.0
        %1481 = vmatprep.subr.mxu0 0.0
        %1482 = vmatpush1.msra.mxu0 0.0
        %1483 = vmatprep.subr.mxu0 0.0
        %1484 = vmatpush1.msra.mxu0 0.0
        %1485 = vmatprep.subr.mxu0 0.0
        %1486 = vmatpush1.msra.mxu0 0.0
        %1487 = vmatprep.subr.mxu0 0.0
        %1488 = vmatpush1.msra.mxu0 0.0
        %1489 = vmatprep.subr.mxu0 0.0
        %1490 = vmatpush1.msra.mxu0 0.0
        %1491 = vmatprep.subr.mxu0 0.0
        %1492 = vmatpush1.msra.mxu0 0.0
        %1493 = vmatprep.subr.mxu0 0.0
        %1494 = vmatpush1.msra.mxu0 0.0
        %1495 = vmatprep.subr.mxu0 0.0
        %1496 = vmatpush1.msra.mxu0 0.0
        %1497 = vmatprep.mubr.f32.mxu0 0.0
        %1498 = vmatmul.mubr.f32.gmra.mrb[0].mxu0 %v1431
        %v1499 = vpop.f32.mrb[0].mxu0
        %v1500 = vadd.f32 0.0, %v1499
        %v1501 = vpop.f32.mrb[0].mxu0
        %1502 = vdwg.mxu0
        %1504 = vrot.lane.b32.xlu0 %v1500, 16
        %v1505 = vpop.permute.xlu0 %1504
        %v1507 = vsel %vm1167, %v1332, %v1505
        %v1509 = vsel %vm1167, %v1036, 0
        %v1512 = vsel %vm1167, %v1100, 0
        %1514 = vmatprep.subr.mxu0 0.0
        %1515 = vmatpush1.xpose.msra.mxu0 %v1512
        %1516 = vmatprep.subr.mxu0 0.0
        %1517 = vmatpush1.xpose.msra.mxu0 0.0
        %1518 = vmatprep.subr.mxu0 0.0
        %1519 = vmatpush1.xpose.msra.mxu0 0.0
        %1520 = vmatprep.subr.mxu0 0.0
        %1521 = vmatpush1.xpose.msra.mxu0 0.0
        %1522 = vmatprep.subr.mxu0 0.0
        %1523 = vmatpush1.xpose.msra.mxu0 0.0
        %1524 = vmatprep.subr.mxu0 0.0
        %1525 = vmatpush1.xpose.msra.mxu0 0.0
        %1526 = vmatprep.subr.mxu0 0.0
        %1527 = vmatpush1.xpose.msra.mxu0 0.0
        %1528 = vmatprep.subr.mxu0 0.0
        %1529 = vmatpush1.xpose.msra.mxu0 0.0
        %1530 = vmatprep.subr.mxu0 0.0
        %1531 = vmatpush1.xpose.msra.mxu0 0.0
        %1532 = vmatprep.subr.mxu0 0.0
        %1533 = vmatpush1.xpose.msra.mxu0 0.0
        %1534 = vmatprep.subr.mxu0 0.0
        %1535 = vmatpush1.xpose.msra.mxu0 0.0
        %1536 = vmatprep.subr.mxu0 0.0
        %1537 = vmatpush1.xpose.msra.mxu0 0.0
        %1538 = vmatprep.subr.mxu0 0.0
        %1539 = vmatpush1.xpose.msra.mxu0 0.0
        %1540 = vmatprep.subr.mxu0 0.0
        %1541 = vmatpush1.xpose.msra.mxu0 0.0
        %1542 = vmatprep.subr.mxu0 0.0
        %1543 = vmatpush1.xpose.msra.mxu0 0.0
        %1544 = vmatprep.subr.mxu0 0.0
        %1545 = vmatpush1.xpose.msra.mxu0 0.0
        %1546 = vmatprep.subr.mxu0 0.0
        %1547 = vmatpush1.xpose.msra.mxu0 0.0
        %1548 = vmatprep.subr.mxu0 0.0
        %1549 = vmatpush1.xpose.msra.mxu0 0.0
        %1550 = vmatprep.subr.mxu0 0.0
        %1551 = vmatpush1.xpose.msra.mxu0 0.0
        %1552 = vmatprep.subr.mxu0 0.0
        %1553 = vmatpush1.xpose.msra.mxu0 0.0
        %1554 = vmatprep.subr.mxu0 0.0
        %1555 = vmatpush1.xpose.msra.mxu0 0.0
        %1556 = vmatprep.subr.mxu0 0.0
        %1557 = vmatpush1.xpose.msra.mxu0 0.0
        %1558 = vmatprep.subr.mxu0 0.0
        %1559 = vmatpush1.xpose.msra.mxu0 0.0
        %1560 = vmatprep.subr.mxu0 0.0
        %1561 = vmatpush1.xpose.msra.mxu0 0.0
        %1562 = vmatprep.subr.mxu0 0.0
        %1563 = vmatpush1.xpose.msra.mxu0 0.0
        %1564 = vmatprep.subr.mxu0 0.0
        %1565 = vmatpush1.xpose.msra.mxu0 0.0
        %1566 = vmatprep.subr.mxu0 0.0
        %1567 = vmatpush1.xpose.msra.mxu0 0.0
        %1568 = vmatprep.subr.mxu0 0.0
        %1569 = vmatpush1.xpose.msra.mxu0 0.0
        %1570 = vmatprep.subr.mxu0 0.0
        %1571 = vmatpush1.xpose.msra.mxu0 0.0
        %1572 = vmatprep.subr.mxu0 0.0
        %1573 = vmatpush1.xpose.msra.mxu0 0.0
        %1574 = vmatprep.subr.mxu0 0.0
        %1575 = vmatpush1.xpose.msra.mxu0 0.0
        %1576 = vmatprep.subr.mxu0 0.0
        %1577 = vmatpush1.xpose.msra.mxu0 0.0
        %1578 = vmatprep.mubr.f32.mxu0 0.0
        %1579 = vmatmul.mubr.f32.gmra.mrb[0].mxu0 %v1509
        %v1580 = vpop.f32.mrb[0].mxu0
        %v1581 = vadd.f32 0.0, %v1580
        %v1582 = vpop.f32.mrb[0].mxu0
        %1583 = vdwg.mxu0
        %v1584 = vmul.f32 %v1581, 0.25
        %v1585 = vlaneseq
        %v1586 = vshrl.u32 %v1585, 7
        %v1587 = vsub.s32 1, %v1586
        %v1588 = vrot.slane %v924, %v1587
        %v1589 = vadd.f32 %v1584, %v1588
        %v1590 = vsel %vm1250, %v1589, -inf
        %1591 = vmax.xlane.f32.xlu0 %v1590
        %v1592 = vpop.xlane.xlu0 %1591
        %v1593 = vsub.f32 %v1589, %v1592
        %v1594 = vmul.f32 %v1593, 1.442695
        %v1595 = vpow.pop %v1594
        %v1596 = vsel %vm1250, %v1595, 0.0
        %1597 = vadd.xlane.f32.xlu0 %v1596
        %v1598 = vpop.xlane.xlu0 %1597
        %v1599 = vrcp.pop %v1598
        %v1600 = vmul.f32 %v1595, %v1599
        %v1602 = vsel %vm1250, %v1600, 0
        %1604 = vmatprep.subr.mxu0 0.0
        %1605 = vmatpush1.msra.mxu0 %v1164
        %1606 = vmatprep.subr.mxu0 0.0
        %1607 = vmatpush1.msra.mxu0 0.0
        %1608 = vmatprep.subr.mxu0 0.0
        %1609 = vmatpush1.msra.mxu0 0.0
        %1610 = vmatprep.subr.mxu0 0.0
        %1611 = vmatpush1.msra.mxu0 0.0
        %1612 = vmatprep.subr.mxu0 0.0
        %1613 = vmatpush1.msra.mxu0 0.0
        %1614 = vmatprep.subr.mxu0 0.0
        %1615 = vmatpush1.msra.mxu0 0.0
        %1616 = vmatprep.subr.mxu0 0.0
        %1617 = vmatpush1.msra.mxu0 0.0
        %1618 = vmatprep.subr.mxu0 0.0
        %1619 = vmatpush1.msra.mxu0 0.0
        %1620 = vmatprep.subr.mxu0 0.0
        %1621 = vmatpush1.msra.mxu0 0.0
        %1622 = vmatprep.subr.mxu0 0.0
        %1623 = vmatpush1.msra.mxu0 0.0
        %1624 = vmatprep.subr.mxu0 0.0
        %1625 = vmatpush1.msra.mxu0 0.0
        %1626 = vmatprep.subr.mxu0 0.0
        %1627 = vmatpush1.msra.mxu0 0.0
        %1628 = vmatprep.subr.mxu0 0.0
        %1629 = vmatpush1.msra.mxu0 0.0
        %1630 = vmatprep.subr.mxu0 0.0
        %1631 = vmatpush1.msra.mxu0 0.0
        %1632 = vmatprep.subr.mxu0 0.0
        %1633 = vmatpush1.msra.mxu0 0.0
        %1634 = vmatprep.subr.mxu0 0.0
        %1635 = vmatpush1.msra.mxu0 0.0
        %1636 = vmatprep.subr.mxu0 0.0
        %1637 = vmatpush1.msra.mxu0 0.0
        %1638 = vmatprep.subr.mxu0 0.0
        %1639 = vmatpush1.msra.mxu0 0.0
        %1640 = vmatprep.subr.mxu0 0.0
        %1641 = vmatpush1.msra.mxu0 0.0
        %1642 = vmatprep.subr.mxu0 0.0
        %1643 = vmatpush1.msra.mxu0 0.0
        %1644 = vmatprep.subr.mxu0 0.0
        %1645 = vmatpush1.msra.mxu0 0.0
        %1646 = vmatprep.subr.mxu0 0.0
        %1647 = vmatpush1.msra.mxu0 0.0
        %1648 = vmatprep.subr.mxu0 0.0
        %1649 = vmatpush1.msra.mxu0 0.0
        %1650 = vmatprep.subr.mxu0 0.0
        %1651 = vmatpush1.msra.mxu0 0.0
        %1652 = vmatprep.subr.mxu0 0.0
        %1653 = vmatpush1.msra.mxu0 0.0
        %1654 = vmatprep.subr.mxu0 0.0
        %1655 = vmatpush1.msra.mxu0 0.0
        %1656 = vmatprep.subr.mxu0 0.0
        %1657 = vmatpush1.msra.mxu0 0.0
        %1658 = vmatprep.subr.mxu0 0.0
        %1659 = vmatpush1.msra.mxu0 0.0
        %1660 = vmatprep.subr.mxu0 0.0
        %1661 = vmatpush1.msra.mxu0 0.0
        %1662 = vmatprep.subr.mxu0 0.0
        %1663 = vmatpush1.msra.mxu0 0.0
        %1664 = vmatprep.subr.mxu0 0.0
        %1665 = vmatpush1.msra.mxu0 0.0
        %1666 = vmatprep.subr.mxu0 0.0
        %1667 = vmatpush1.msra.mxu0 0.0
        %1668 = vmatprep.mubr.f32.mxu0 0.0
        %1669 = vmatmul.mubr.f32.gmra.mrb[0].mxu0 %v1602
        %v1670 = vpop.f32.mrb[0].mxu0
        %v1671 = vadd.f32 0.0, %v1670
        %v1672 = vpop.f32.mrb[0].mxu0
        %1673 = vdwg.mxu0
        %1674 = vrot.lane.b32.xlu0 %v1036, 112
        %v1675 = vpop.permute.xlu0 %1674
        %1676 = vrot.lane.b32.xlu0 %v1100, 112
        %v1677 = vpop.permute.xlu0 %1676
        %v1678 = vsel %vm1167, %v1675, 0
        %v1680 = vsel %vm1167, %v1677, 0
        %1682 = vmatprep.subr.mxu0 0.0
        %1683 = vmatpush1.xpose.msra.mxu0 %v1680
        %1684 = vmatprep.subr.mxu0 0.0
        %1685 = vmatpush1.xpose.msra.mxu0 0.0
        %1686 = vmatprep.subr.mxu0 0.0
        %1687 = vmatpush1.xpose.msra.mxu0 0.0
        %1688 = vmatprep.subr.mxu0 0.0
        %1689 = vmatpush1.xpose.msra.mxu0 0.0
        %1690 = vmatprep.subr.mxu0 0.0
        %1691 = vmatpush1.xpose.msra.mxu0 0.0
        %1692 = vmatprep.subr.mxu0 0.0
        %1693 = vmatpush1.xpose.msra.mxu0 0.0
        %1694 = vmatprep.subr.mxu0 0.0
        %1695 = vmatpush1.xpose.msra.mxu0 0.0
        %1696 = vmatprep.subr.mxu0 0.0
        %1697 = vmatpush1.xpose.msra.mxu0 0.0
        %1698 = vmatprep.subr.mxu0 0.0
        %1699 = vmatpush1.xpose.msra.mxu0 0.0
        %1700 = vmatprep.subr.mxu0 0.0
        %1701 = vmatpush1.xpose.msra.mxu0 0.0
        %1702 = vmatprep.subr.mxu0 0.0
        %1703 = vmatpush1.xpose.msra.mxu0 0.0
        %1704 = vmatprep.subr.mxu0 0.0
        %1705 = vmatpush1.xpose.msra.mxu0 0.0
        %1706 = vmatprep.subr.mxu0 0.0
        %1707 = vmatpush1.xpose.msra.mxu0 0.0
        %1708 = vmatprep.subr.mxu0 0.0
        %1709 = vmatpush1.xpose.msra.mxu0 0.0
        %1710 = vmatprep.subr.mxu0 0.0
        %1711 = vmatpush1.xpose.msra.mxu0 0.0
        %1712 = vmatprep.subr.mxu0 0.0
        %1713 = vmatpush1.xpose.msra.mxu0 0.0
        %1714 = vmatprep.subr.mxu0 0.0
        %1715 = vmatpush1.xpose.msra.mxu0 0.0
        %1716 = vmatprep.subr.mxu0 0.0
        %1717 = vmatpush1.xpose.msra.mxu0 0.0
        %1718 = vmatprep.subr.mxu0 0.0
        %1719 = vmatpush1.xpose.msra.mxu0 0.0
        %1720 = vmatprep.subr.mxu0 0.0
        %1721 = vmatpush1.xpose.msra.mxu0 0.0
        %1722 = vmatprep.subr.mxu0 0.0
        %1723 = vmatpush1.xpose.msra.mxu0 0.0
        %1724 = vmatprep.subr.mxu0 0.0
        %1725 = vmatpush1.xpose.msra.mxu0 0.0
        %1726 = vmatprep.subr.mxu0 0.0
        %1727 = vmatpush1.xpose.msra.mxu0 0.0
        %1728 = vmatprep.subr.mxu0 0.0
        %1729 = vmatpush1.xpose.msra.mxu0 0.0
        %1730 = vmatprep.subr.mxu0 0.0
        %1731 = vmatpush1.xpose.msra.mxu0 0.0
        %1732 = vmatprep.subr.mxu0 0.0
        %1733 = vmatpush1.xpose.msra.mxu0 0.0
        %1734 = vmatprep.subr.mxu0 0.0
        %1735 = vmatpush1.xpose.msra.mxu0 0.0
        %1736 = vmatprep.subr.mxu0 0.0
        %1737 = vmatpush1.xpose.msra.mxu0 0.0
        %1738 = vmatprep.subr.mxu0 0.0
        %1739 = vmatpush1.xpose.msra.mxu0 0.0
        %1740 = vmatprep.subr.mxu0 0.0
        %1741 = vmatpush1.xpose.msra.mxu0 0.0
        %1742 = vmatprep.subr.mxu0 0.0
        %1743 = vmatpush1.xpose.msra.mxu0 0.0
        %1744 = vmatprep.subr.mxu0 0.0
        %1745 = vmatpush1.xpose.msra.mxu0 0.0
        %1746 = vmatprep.mubr.f32.mxu0 0.0
        %1747 = vmatmul.mubr.f32.gmra.mrb[0].mxu0 %v1678
        %v1748 = vpop.f32.mrb[0].mxu0
        %v1749 = vadd.f32 0.0, %v1748
        %v1750 = vpop.f32.mrb[0].mxu0
        %1751 = vdwg.mxu0
        %v1752 = vmul.f32 %v1749, 0.25
        %v1753 = vadd.f32 %v1752, %v1588
        %v1754 = vsel %vm1250, %v1753, -inf
        %1755 = vmax.xlane.f32.xlu0 %v1754
        %v1756 = vpop.xlane.xlu0 %1755
        %v1757 = vsub.f32 %v1753, %v1756
        %v1758 = vmul.f32 %v1757, 1.442695
        %v1759 = vpow.pop %v1758
        %v1760 = vsel %vm1250, %v1759, 0.0
        %1761 = vadd.xlane.f32.xlu0 %v1760
        %v1762 = vpop.xlane.xlu0 %1761
        %v1763 = vrcp.pop %v1762
        %v1764 = vmul.f32 %v1759, %v1763
        %1766 = vrot.lane.b32.xlu0 %v1164, 112
        %v1767 = vpop.permute.xlu0 %1766
        %v1770 = vsel %vm1250, %v1764, 0
        %1772 = vmatprep.subr.mxu0 0.0
        %1773 = vmatpush1.msra.mxu0 %v1767
        %1774 = vmatprep.subr.mxu0 0.0
        %1775 = vmatpush1.msra.mxu0 0.0
        %1776 = vmatprep.subr.mxu0 0.0
        %1777 = vmatpush1.msra.mxu0 0.0
        %1778 = vmatprep.subr.mxu0 0.0
        %1779 = vmatpush1.msra.mxu0 0.0
        %1780 = vmatprep.subr.mxu0 0.0
        %1781 = vmatpush1.msra.mxu0 0.0
        %1782 = vmatprep.subr.mxu0 0.0
        %1783 = vmatpush1.msra.mxu0 0.0
        %1784 = vmatprep.subr.mxu0 0.0
        %1785 = vmatpush1.msra.mxu0 0.0
        %1786 = vmatprep.subr.mxu0 0.0
        %1787 = vmatpush1.msra.mxu0 0.0
        %1788 = vmatprep.subr.mxu0 0.0
        %1789 = vmatpush1.msra.mxu0 0.0
        %1790 = vmatprep.subr.mxu0 0.0
        %1791 = vmatpush1.msra.mxu0 0.0
        %1792 = vmatprep.subr.mxu0 0.0
        %1793 = vmatpush1.msra.mxu0 0.0
        %1794 = vmatprep.subr.mxu0 0.0
        %1795 = vmatpush1.msra.mxu0 0.0
        %1796 = vmatprep.subr.mxu0 0.0
        %1797 = vmatpush1.msra.mxu0 0.0
        %1798 = vmatprep.subr.mxu0 0.0
        %1799 = vmatpush1.msra.mxu0 0.0
        %1800 = vmatprep.subr.mxu0 0.0
        %1801 = vmatpush1.msra.mxu0 0.0
        %1802 = vmatprep.subr.mxu0 0.0
        %1803 = vmatpush1.msra.mxu0 0.0
        %1804 = vmatprep.subr.mxu0 0.0
        %1805 = vmatpush1.msra.mxu0 0.0
        %1806 = vmatprep.subr.mxu0 0.0
        %1807 = vmatpush1.msra.mxu0 0.0
        %1808 = vmatprep.subr.mxu0 0.0
        %1809 = vmatpush1.msra.mxu0 0.0
        %1810 = vmatprep.subr.mxu0 0.0
        %1811 = vmatpush1.msra.mxu0 0.0
        %1812 = vmatprep.subr.mxu0 0.0
        %1813 = vmatpush1.msra.mxu0 0.0
        %1814 = vmatprep.subr.mxu0 0.0
        %1815 = vmatpush1.msra.mxu0 0.0
        %1816 = vmatprep.subr.mxu0 0.0
        %1817 = vmatpush1.msra.mxu0 0.0
        %1818 = vmatprep.subr.mxu0 0.0
        %1819 = vmatpush1.msra.mxu0 0.0
        %1820 = vmatprep.subr.mxu0 0.0
        %1821 = vmatpush1.msra.mxu0 0.0
        %1822 = vmatprep.subr.mxu0 0.0
        %1823 = vmatpush1.msra.mxu0 0.0
        %1824 = vmatprep.subr.mxu0 0.0
        %1825 = vmatpush1.msra.mxu0 0.0
        %1826 = vmatprep.subr.mxu0 0.0
        %1827 = vmatpush1.msra.mxu0 0.0
        %1828 = vmatprep.subr.mxu0 0.0
        %1829 = vmatpush1.msra.mxu0 0.0
        %1830 = vmatprep.subr.mxu0 0.0
        %1831 = vmatpush1.msra.mxu0 0.0
        %1832 = vmatprep.subr.mxu0 0.0
        %1833 = vmatpush1.msra.mxu0 0.0
        %1834 = vmatprep.subr.mxu0 0.0
        %1835 = vmatpush1.msra.mxu0 0.0
        %1836 = vmatprep.mubr.f32.mxu0 0.0
        %1837 = vmatmul.mubr.f32.gmra.mrb[0].mxu0 %v1770
        %v1838 = vpop.f32.mrb[0].mxu0
        %v1839 = vadd.f32 0.0, %v1838
        %v1840 = vpop.f32.mrb[0].mxu0
        %1841 = vdwg.mxu0
        %1843 = vrot.lane.b32.xlu0 %v1839, 16
        %v1844 = vpop.permute.xlu0 %1843
        %v1846 = vsel %vm1167, %v1671, %v1844
        %v1847 = vpack.c.bf16 %v1846, %v1507
        %v1848 = vld [vmem:[%s878] sm:$0xf]
        %v1849 = vld [vmem:[%s878 + $0x4] sm:$0xf]
        %v1850 = vld [vmem:[%s878 + $0x8] sm:$0xf]
        %v1851 = vld [vmem:[%s878 + $0xc] sm:$0xf]
        %v1852 = vld [vmem:[%s881] sm:$0x1]
        %v1854 = vlaneseq
        %v1855 = vshrl.u32 %v1854, 7
        %v1856 = vsub.s32 0, %v1855
        %v1857 = vrot.slane %v1852, %v1856
        %v1863 = vunpack.c.l.b16 %v1848
        %v1864 = vunpack.c.l.b16 %v1849
        %v1865 = vunpack.c.l.b16 %v1850
        %v1866 = vunpack.c.l.b16 %v1851
        %v1867 = vpack.c.b16 %v1864, %v1863
        %v1868 = vpack.c.b16 %v1866, %v1865
        %v1872 = vsel %vm927, %v1847, 0
        %1874 = vmatprep.subr.bf16.mxu0 0
        %1875 = vmatpush1.bf16.msra.mxu0 %v1867
        %1876 = vmatprep.subr.bf16.mxu0 0
        %1877 = vmatpush1.bf16.msra.mxu0 %v1868
        %1878 = vmatprep.subr.bf16.mxu0 0
        %1879 = vmatpush1.bf16.msra.mxu0 0
        %1880 = vmatprep.subr.bf16.mxu0 0
        %1881 = vmatpush1.bf16.msra.mxu0 0
        %1882 = vmatprep.subr.bf16.mxu0 0
        %1883 = vmatpush1.bf16.msra.mxu0 0
        %1884 = vmatprep.subr.bf16.mxu0 0
        %1885 = vmatpush1.bf16.msra.mxu0 0
        %1886 = vmatprep.subr.bf16.mxu0 0
        %1887 = vmatpush1.bf16.msra.mxu0 0
        %1888 = vmatprep.subr.bf16.mxu0 0
        %1889 = vmatpush1.bf16.msra.mxu0 0
        %1890 = vmatprep.subr.bf16.mxu0 0
        %1891 = vmatpush1.bf16.msra.mxu0 0
        %1892 = vmatprep.subr.bf16.mxu0 0
        %1893 = vmatpush1.bf16.msra.mxu0 0
        %1894 = vmatprep.subr.bf16.mxu0 0
        %1895 = vmatpush1.bf16.msra.mxu0 0
        %1896 = vmatprep.subr.bf16.mxu0 0
        %1897 = vmatpush1.bf16.msra.mxu0 0
        %1898 = vmatprep.subr.bf16.mxu0 0
        %1899 = vmatpush1.bf16.msra.mxu0 0
        %1900 = vmatprep.subr.bf16.mxu0 0
        %1901 = vmatpush1.bf16.msra.mxu0 0
        %1902 = vmatprep.subr.bf16.mxu0 0
        %1903 = vmatpush1.bf16.msra.mxu0 0
        %1904 = vmatprep.subr.bf16.mxu0 0
        %1905 = vmatpush1.bf16.msra.mxu0 0
        %1906 = vmatprep.mubr.bf16.mxu0 0
        %1907 = vmatmul.mubr.bf16.gmra.mrb[0].mxu0 %v1872
        %v1908 = vpop.f32.mrb[0].mxu0
        %v1909 = vadd.f32 %v1857, %v1908
        %v1910 = vpop.f32.mrb[0].mxu0
        %v1911 = vpop.f32.mrb[0].mxu0
        %v1912 = vadd.f32 %v1857, %v1911
        %v1913 = vpop.f32.mrb[0].mxu0
        %1914 = vdwg.mxu0
        %v1915 = vadd.f32 %v922, %v1909
        %v1916 = vadd.f32 %v923, %v1912
        %v1917 = vld [vmem:[%s890] sm:$0x1]
        %v1918 = vld [vmem:[%s893] sm:$0x1]
        %v1919 = vsel %vm927, %v1915, 0.0
        %1920 = vadd.xlane.f32.xlu0 %v1919
        %v1921 = vpop.xlane.xlu0 %1920
        %v1922 = vsel %vm927, %v1916, 0.0
        %1923 = vadd.xlane.f32.xlu0 %v1922
        %v1924 = vpop.xlane.xlu0 %1923
        %v1925 = vmul.f32 %v1921, %v934
        %v1926 = vmul.f32 %v1924, %v934
        %v1927 = vsub.f32 %v1915, %v1925
        %v1928 = vsub.f32 %v1916, %v1926
        %v1929 = vmul.f32 %v1927, %v1927
        %v1930 = vmul.f32 %v1928, %v1928
        %v1931 = vsel %vm927, %v1929, 0.0
        %1932 = vadd.xlane.f32.xlu0 %v1931
        %v1933 = vpop.xlane.xlu0 %1932
        %v1934 = vsel %vm927, %v1930, 0.0
        %1935 = vadd.xlane.f32.xlu0 %v1934
        %v1936 = vpop.xlane.xlu0 %1935
        %v1937 = vmul.f32 %v1933, %v934
        %v1938 = vmul.f32 %v1936, %v934
        %v1939 = vadd.f32 %v1937, 1e-06
        %v1940 = vadd.f32 %v1938, 1e-06
        %v1941 = vrsqrt.pop %v1939
        %v1942 = vrsqrt.pop %v1940
        %v1943 = vmul.f32 %v1927, %v1941
        %v1944 = vmul.f32 %v1928, %v1942
        %v1946 = vlaneseq
        %v1947 = vshrl.u32 %v1946, 7
        %v1948 = vsub.s32 0, %v1947
        %v1949 = vrot.slane %v1917, %v1948
        %v1951 = vmul.f32 %v1943, %v1949
        %v1952 = vmul.f32 %v1944, %v1949
        %v1954 = vlaneseq
        %v1955 = vshrl.u32 %v1954, 7
        %v1956 = vsub.s32 0, %v1955
        %v1957 = vrot.slane %v1918, %v1956
        %v1959 = vadd.f32 %v1951, %v1957
        %v1960 = vadd.f32 %v1952, %v1957
        %v1961 = vpack.c.bf16 %v1960, %v1959
        %v1962 = vld [vmem:[%s898] sm:$0xf]
        %v1963 = vld [vmem:[%s898 + $0x4] sm:$0xf]
        %v1964 = vld [vmem:[%s898 + $0x8] sm:$0xf]
        %v1965 = vld [vmem:[%s898 + $0xc] sm:$0xf]
        %v1966 = vld [vmem:[%s901] sm:$0x1]
        %v1968 = vlaneseq
        %v1969 = vshrl.u32 %v1968, 7
        %v1970 = vsub.s32 0, %v1969
        %v1971 = vrot.slane %v1966, %v1970
        %v1977 = vunpack.c.l.b16 %v1962
        %v1978 = vunpack.c.l.b16 %v1963
        %v1979 = vunpack.c.l.b16 %v1964
        %v1980 = vunpack.c.l.b16 %v1965
        %v1981 = vpack.c.b16 %v1978, %v1977
        %v1982 = vpack.c.b16 %v1980, %v1979
        %v1986 = vsel %vm927, %v1961, 0
        %1988 = vmatprep.subr.bf16.mxu0 0
        %1989 = vmatpush1.bf16.msra.mxu0 %v1981
        %1990 = vmatprep.subr.bf16.mxu0 0
        %1991 = vmatpush1.bf16.msra.mxu0 %v1982
        %1992 = vmatprep.subr.bf16.mxu0 0
        %1993 = vmatpush1.bf16.msra.mxu0 0
        %1994 = vmatprep.subr.bf16.mxu0 0
        %1995 = vmatpush1.bf16.msra.mxu0 0
        %1996 = vmatprep.subr.bf16.mxu0 0
        %1997 = vmatpush1.bf16.msra.mxu0 0
        %1998 = vmatprep.subr.bf16.mxu0 0
        %1999 = vmatpush1.bf16.msra.mxu0 0
        %2000 = vmatprep.subr.bf16.mxu0 0
        %2001 = vmatpush1.bf16.msra.mxu0 0
        %2002 = vmatprep.subr.bf16.mxu0 0
        %2003 = vmatpush1.bf16.msra.mxu0 0
        %2004 = vmatprep.subr.bf16.mxu0 0
        %2005 = vmatpush1.bf16.msra.mxu0 0
        %2006 = vmatprep.subr.bf16.mxu0 0
        %2007 = vmatpush1.bf16.msra.mxu0 0
        %2008 = vmatprep.subr.bf16.mxu0 0
        %2009 = vmatpush1.bf16.msra.mxu0 0
        %2010 = vmatprep.subr.bf16.mxu0 0
        %2011 = vmatpush1.bf16.msra.mxu0 0
        %2012 = vmatprep.subr.bf16.mxu0 0
        %2013 = vmatpush1.bf16.msra.mxu0 0
        %2014 = vmatprep.subr.bf16.mxu0 0
        %2015 = vmatpush1.bf16.msra.mxu0 0
        %2016 = vmatprep.subr.bf16.mxu0 0
        %2017 = vmatpush1.bf16.msra.mxu0 0
        %2018 = vmatprep.subr.bf16.mxu0 0
        %2019 = vmatpush1.bf16.msra.mxu0 0
        %2020 = vmatprep.mubr.bf16.mxu0 0
        %2021 = vmatmul.mubr.bf16.gmra.mrb[0].mxu0 %v1986
        %v2022 = vpop.f32.mrb[0].mxu0
        %v2023 = vadd.f32 %v1971, %v2022
        %v2024 = vpop.f32.mrb[0].mxu0
        %v2025 = vpop.f32.mrb[0].mxu0
        %v2026 = vadd.f32 %v1971, %v2025
        %v2027 = vpop.f32.mrb[0].mxu0
        %2028 = vdwg.mxu0
        %v2029 = vmul.f32 %v2023, %v2023
        %v2030 = vmul.f32 %v2026, %v2026
        %v2031 = vmul.f32 %v2023, %v2029
        %v2032 = vmul.f32 %v2026, %v2030
        %v2033 = vmul.f32 %v2031, 0.044715
        %v2034 = vmul.f32 %v2032, 0.044715
        %v2035 = vadd.f32 %v2023, %v2033
        %v2036 = vadd.f32 %v2026, %v2034
        %v2037 = vmul.f32 %v2035, 0.7978846
        %v2038 = vmul.f32 %v2036, 0.7978846
        %v2039 = vtanh.pop %v2037
        %v2040 = vtanh.pop %v2038
        %v2041 = vadd.f32 %v2039, 1.0
        %v2042 = vadd.f32 %v2040, 1.0
        %v2043 = vmul.f32 %v2041, 0.5
        %v2044 = vmul.f32 %v2042, 0.5
        %v2045 = vmul.f32 %v2023, %v2043
        %v2046 = vmul.f32 %v2026, %v2044
        %v2047 = vpack.c.bf16 %v2046, %v2045
        %v2048 = vld [vmem:[%s906] sm:$0xf]
        %v2049 = vld [vmem:[%s906 + $0x4] sm:$0xf]
        %v2050 = vld [vmem:[%s906 + $0x8] sm:$0xf]
        %v2051 = vld [vmem:[%s906 + $0xc] sm:$0xf]
        %v2052 = vld [vmem:[%s906 + $0x10] sm:$0xf]
        %v2053 = vld [vmem:[%s906 + $0x14] sm:$0xf]
        %v2054 = vld [vmem:[%s906 + $0x18] sm:$0xf]
        %v2055 = vld [vmem:[%s906 + $0x1c] sm:$0xf]
        %v2056 = vld [vmem:[%s906 + $0x20] sm:$0xf]
        %v2057 = vld [vmem:[%s906 + $0x24] sm:$0xf]
        %v2058 = vld [vmem:[%s906 + $0x28] sm:$0xf]
        %v2059 = vld [vmem:[%s906 + $0x2c] sm:$0xf]
        %v2060 = vld [vmem:[%s906 + $0x30] sm:$0xf]
        %v2061 = vld [vmem:[%s906 + $0x34] sm:$0xf]
        %v2062 = vld [vmem:[%s906 + $0x38] sm:$0xf]
        %v2063 = vld [vmem:[%s906 + $0x3c] sm:$0xf]
        %v2064 = vld [vmem:[%s909] sm:$0x1]
        %v2066 = vlaneseq
        %v2067 = vshrl.u32 %v2066, 7
        %v2068 = vsub.s32 0, %v2067
        %v2069 = vrot.slane %v2064, %v2068
        %v2087 = vunpack.c.l.b16 %v2048
        %v2088 = vunpack.c.l.b16 %v2049
        %v2089 = vunpack.c.l.b16 %v2050
        %v2090 = vunpack.c.l.b16 %v2051
        %v2091 = vunpack.c.l.b16 %v2052
        %v2092 = vunpack.c.l.b16 %v2053
        %v2093 = vunpack.c.l.b16 %v2054
        %v2094 = vunpack.c.l.b16 %v2055
        %v2095 = vunpack.c.l.b16 %v2056
        %v2096 = vunpack.c.l.b16 %v2057
        %v2097 = vunpack.c.l.b16 %v2058
        %v2098 = vunpack.c.l.b16 %v2059
        %v2099 = vunpack.c.l.b16 %v2060
        %v2100 = vunpack.c.l.b16 %v2061
        %v2101 = vunpack.c.l.b16 %v2062
        %v2102 = vunpack.c.l.b16 %v2063
        %v2103 = vpack.c.b16 %v2088, %v2087
        %v2104 = vpack.c.b16 %v2090, %v2089
        %v2105 = vpack.c.b16 %v2092, %v2091
        %v2106 = vpack.c.b16 %v2094, %v2093
        %v2107 = vpack.c.b16 %v2096, %v2095
        %v2108 = vpack.c.b16 %v2098, %v2097
        %v2109 = vpack.c.b16 %v2100, %v2099
        %v2110 = vpack.c.b16 %v2102, %v2101
        %2119 = vmatprep.subr.bf16.mxu0 0
        %2120 = vmatpush1.bf16.msra.mxu0 %v2103
        %2121 = vmatprep.subr.bf16.mxu0 0
        %2122 = vmatpush1.bf16.msra.mxu0 %v2104
        %2123 = vmatprep.subr.bf16.mxu0 0
        %2124 = vmatpush1.bf16.msra.mxu0 %v2105
        %2125 = vmatprep.subr.bf16.mxu0 0
        %2126 = vmatpush1.bf16.msra.mxu0 %v2106
        %2127 = vmatprep.subr.bf16.mxu0 0
        %2128 = vmatpush1.bf16.msra.mxu0 %v2107
        %2129 = vmatprep.subr.bf16.mxu0 0
        %2130 = vmatpush1.bf16.msra.mxu0 %v2108
        %2131 = vmatprep.subr.bf16.mxu0 0
        %2132 = vmatpush1.bf16.msra.mxu0 %v2109
        %2133 = vmatprep.subr.bf16.mxu0 0
        %2134 = vmatpush1.bf16.msra.mxu0 %v2110
        %2135 = vmatprep.subr.bf16.mxu0 0
        %2136 = vmatpush1.bf16.msra.mxu0 0
        %2137 = vmatprep.subr.bf16.mxu0 0
        %2138 = vmatpush1.bf16.msra.mxu0 0
        %2139 = vmatprep.subr.bf16.mxu0 0
        %2140 = vmatpush1.bf16.msra.mxu0 0
        %2141 = vmatprep.subr.bf16.mxu0 0
        %2142 = vmatpush1.bf16.msra.mxu0 0
        %2143 = vmatprep.subr.bf16.mxu0 0
        %2144 = vmatpush1.bf16.msra.mxu0 0
        %2145 = vmatprep.subr.bf16.mxu0 0
        %2146 = vmatpush1.bf16.msra.mxu0 0
        %2147 = vmatprep.subr.bf16.mxu0 0
        %2148 = vmatpush1.bf16.msra.mxu0 0
        %2149 = vmatprep.subr.bf16.mxu0 0
        %2150 = vmatpush1.bf16.msra.mxu0 0
        %2151 = vmatprep.mubr.bf16.mxu0 0
        %2152 = vmatmul.mubr.bf16.gmra.mrb[0].mxu0 %v2047
        %v2153 = vpop.f32.mrb[0].mxu0
        %v2154 = vadd.f32 %v2069, %v2153
        %v2155 = vpop.f32.mrb[0].mxu0
        %v2156 = vpop.f32.mrb[0].mxu0
        %v2157 = vadd.f32 %v2069, %v2156
        %v2158 = vpop.f32.mrb[0].mxu0
        %2159 = vdwg.mxu0
        %v2160 = vadd.f32 %v1915, %v2154
        %v2161 = vadd.f32 %v1916, %v2157
        %2162 = vst.msk [vmem:[#allocation2] sm:$0xff] %vm927, %v2160
        %2163 = vst.msk [vmem:[#allocation2 + $0x8] sm:$0xff] %vm927, %v2161
        %p2164 = scmp.eq.s32.totalorder %s34, 1
        // Predicated region
        $region113: #{bert_classifier_forward.1} parent=107 // pred_check
          %p2165 = pneg %p2164
        $region114: #{bert_classifier_forward.1} parent=107 // pred_check_branch
          %2167 = sbr.rel (%p2165) target = $region116
        $region115: #{bert_classifier_forward.1} parent=107 // pred_region
          %v2169 = vrot.slane %v2161, 7
          %vm2171 = vcmask 1040384
          %v2172 = vsel %vm2171, %v2160, %v2169
          %v2173 = vld [vmem:[%s19] sm:$0xff]
          %v2174 = vld [vmem:[%s19 + $0x8] sm:$0xff]
          %v2175 = vld [vmem:[%s19 + $0x10] sm:$0xff]
          %v2176 = vld [vmem:[%s19 + $0x18] sm:$0xff]
          %v2177 = vld [vmem:[%s2] sm:$0x3]
          %v2178 = vld [vmem:[%s20] sm:$0xff]
          %v2179 = vld [vmem:[%s20 + $0x8] sm:$0x1]
          %vm2180 = vcmask 72704
          %v2182 = vsel %vm2180, %v2177, 0
          %v2185 = vsel %vm2171, %v2179, 0
          %2187 = vmatprep.subr.mxu0 0.0
          %2188 = vmatpush1.msra.mxu0 %v2178
          %2189 = vmatprep.subr.mxu0 0.0
          %2190 = vmatpush1.msra.mxu0 %v2185
          %2191 = vmatprep.subr.mxu0 0.0
          %2192 = vmatpush1.msra.mxu0 0.0
          %2193 = vmatprep.subr.mxu0 0.0
          %2194 = vmatpush1.msra.mxu0 0.0
          %2195 = vmatprep.subr.mxu0 0.0
          %2196 = vmatpush1.msra.mxu0 0.0
          %2197 = vmatprep.subr.mxu0 0.0
          %2198 = vmatpush1.msra.mxu0 0.0
          %2199 = vmatprep.subr.mxu0 0.0
          %2200 = vmatpush1.msra.mxu0 0.0
          %2201 = vmatprep.subr.mxu0 0.0
          %2202 = vmatpush1.msra.mxu0 0.0
          %2203 = vmatprep.subr.mxu0 0.0
          %2204 = vmatpush1.msra.mxu0 0.0
          %2205 = vmatprep.subr.mxu0 0.0
          %2206 = vmatpush1.msra.mxu0 0.0
          %2207 = vmatprep.subr.mxu0 0.0
          %2208 = vmatpush1.msra.mxu0 0.0
          %2209 = vmatprep.subr.mxu0 0.0
          %2210 = vmatpush1.msra.mxu0 0.0
          %2211 = vmatprep.subr.mxu0 0.0
          %2212 = vmatpush1.msra.mxu0 0.0
          %2213 = vmatprep.subr.mxu0 0.0
          %2214 = vmatpush1.msra.mxu0 0.0
          %2215 = vmatprep.subr.mxu0 0.0
          %2216 = vmatpush1.msra.mxu0 0.0
          %2217 = vmatprep.subr.mxu0 0.0
          %2218 = vmatpush1.msra.mxu0 0.0
          %2219 = vmatprep.subr.mxu0 0.0
          %2220 = vmatpush1.msra.mxu0 0.0
          %2221 = vmatprep.subr.mxu0 0.0
          %2222 = vmatpush1.msra.mxu0 0.0
          %2223 = vmatprep.subr.mxu0 0.0
          %2224 = vmatpush1.msra.mxu0 0.0
          %2225 = vmatprep.subr.mxu0 0.0
          %2226 = vmatpush1.msra.mxu0 0.0
          %2227 = vmatprep.subr.mxu0 0.0
          %2228 = vmatpush1.msra.mxu0 0.0
          %2229 = vmatprep.subr.mxu0 0.0
          %2230 = vmatpush1.msra.mxu0 0.0
          %2231 = vmatprep.subr.mxu0 0.0
          %2232 = vmatpush1.msra.mxu0 0.0
          %2233 = vmatprep.subr.mxu0 0.0
          %2234 = vmatpush1.msra.mxu0 0.0
          %2235 = vmatprep.subr.mxu0 0.0
          %2236 = vmatpush1.msra.mxu0 0.0
          %2237 = vmatprep.subr.mxu0 0.0
          %2238 = vmatpush1.msra.mxu0 0.0
          %2239 = vmatprep.subr.mxu0 0.0
          %2240 = vmatpush1.msra.mxu0 0.0
          %2241 = vmatprep.subr.mxu0 0.0
          %2242 = vmatpush1.msra.mxu0 0.0
          %2243 = vmatprep.subr.mxu0 0.0
          %2244 = vmatpush1.msra.mxu0 0.0
          %2245 = vmatprep.subr.mxu0 0.0
          %2246 = vmatpush1.msra.mxu0 0.0
          %2247 = vmatprep.subr.mxu0 0.0
          %2248 = vmatpush1.msra.mxu0 0.0
          %2249 = vmatprep.subr.mxu0 0.0
          %2250 = vmatpush1.msra.mxu0 0.0
          %2251 = vmatprep.mubr.f32.mxu0 0.0
          %2252 = vmatmul.mubr.f32.gmra.mrb[0].mxu0 %v2182
          %v2253 = vpop.f32.mrb[0].mxu0
          %v2254 = vadd.f32 0.0, %v2253
          %v2255 = vpop.f32.mrb[0].mxu0
          %2256 = vdwg.mxu0
          %v2258 = vsel %vm927, %v2172, 0
          %2260 = vmatprep.subr.mxu0 0.0
          %2261 = vmatpush1.msra.mxu0 %v2173
          %2262 = vmatprep.subr.mxu0 0.0
          %2263 = vmatpush1.msra.mxu0 %v2174
          %2264 = vmatprep.subr.mxu0 0.0
          %2265 = vmatpush1.msra.mxu0 %v2175
          %2266 = vmatprep.subr.mxu0 0.0
          %2267 = vmatpush1.msra.mxu0 %v2176
          %2268 = vmatprep.subr.mxu0 0.0
          %2269 = vmatpush1.msra.mxu0 0.0
          %2270 = vmatprep.subr.mxu0 0.0
          %2271 = vmatpush1.msra.mxu0 0.0
          %2272 = vmatprep.subr.mxu0 0.0
          %2273 = vmatpush1.msra.mxu0 0.0
          %2274 = vmatprep.subr.mxu0 0.0
          %2275 = vmatpush1.msra.mxu0 0.0
          %2276 = vmatprep.subr.mxu0 0.0
          %2277 = vmatpush1.msra.mxu0 0.0
          %2278 = vmatprep.subr.mxu0 0.0
          %2279 = vmatpush1.msra.mxu0 0.0
          %2280 = vmatprep.subr.mxu0 0.0
          %2281 = vmatpush1.msra.mxu0 0.0
          %2282 = vmatprep.subr.mxu0 0.0
          %2283 = vmatpush1.msra.mxu0 0.0
          %2284 = vmatprep.subr.mxu0 0.0
          %2285 = vmatpush1.msra.mxu0 0.0
          %2286 = vmatprep.subr.mxu0 0.0
          %2287 = vmatpush1.msra.mxu0 0.0
          %2288 = vmatprep.subr.mxu0 0.0
          %2289 = vmatpush1.msra.mxu0 0.0
          %2290 = vmatprep.subr.mxu0 0.0
          %2291 = vmatpush1.msra.mxu0 0.0
          %2292 = vmatprep.subr.mxu0 0.0
          %2293 = vmatpush1.msra.mxu0 0.0
          %2294 = vmatprep.subr.mxu0 0.0
          %2295 = vmatpush1.msra.mxu0 0.0
          %2296 = vmatprep.subr.mxu0 0.0
          %2297 = vmatpush1.msra.mxu0 0.0
          %2298 = vmatprep.subr.mxu0 0.0
          %2299 = vmatpush1.msra.mxu0 0.0
          %2300 = vmatprep.subr.mxu0 0.0
          %2301 = vmatpush1.msra.mxu0 0.0
          %2302 = vmatprep.subr.mxu0 0.0
          %2303 = vmatpush1.msra.mxu0 0.0
          %2304 = vmatprep.subr.mxu0 0.0
          %2305 = vmatpush1.msra.mxu0 0.0
          %2306 = vmatprep.subr.mxu0 0.0
          %2307 = vmatpush1.msra.mxu0 0.0
          %2308 = vmatprep.subr.mxu0 0.0
          %2309 = vmatpush1.msra.mxu0 0.0
          %2310 = vmatprep.subr.mxu0 0.0
          %2311 = vmatpush1.msra.mxu0 0.0
          %2312 = vmatprep.subr.mxu0 0.0
          %2313 = vmatpush1.msra.mxu0 0.0
          %2314 = vmatprep.subr.mxu0 0.0
          %2315 = vmatpush1.msra.mxu0 0.0
          %2316 = vmatprep.subr.mxu0 0.0
          %2317 = vmatpush1.msra.mxu0 0.0
          %2318 = vmatprep.subr.mxu0 0.0
          %2319 = vmatpush1.msra.mxu0 0.0
          %2320 = vmatprep.subr.mxu0 0.0
          %2321 = vmatpush1.msra.mxu0 0.0
          %2322 = vmatprep.subr.mxu0 0.0
          %2323 = vmatpush1.msra.mxu0 0.0
          %2324 = vmatprep.mubr.f32.mxu0 0.0
          %2325 = vmatmul.mubr.f32.gmra.mrb[0].mxu0 %v2258
          %v2326 = vpop.f32.mrb[0].mxu0
          %v2327 = vadd.f32 %v2254, %v2326
          %v2328 = vpop.f32.mrb[0].mxu0
          %2329 = vdwg.mxu0
          %v2330 = vld [vmem:[%s21] sm:$0x1]
          %v2332 = vlaneseq
          %v2333 = vshrl.u32 %v2332, 7
          %v2334 = vsub.s32 0, %v2333
          %v2335 = vrot.slane %v2330, %v2334
          %v2337 = vadd.f32 %v2327, %v2335
          %vm2338 = vcmask 17408
          %2339 = vst.msk [vmem:[#allocation3] sm:$0x3] %vm2338, %v2337
        $region116: #{bert_classifier_forward.1} parent=107 // pred_fallthru
          _
        // Predicated region
        $region117: #{bert_classifier_forward.1} parent=107 // pred_check
          %p2340 = pneg %p589
        $region118: #{bert_classifier_forward.1} parent=107 // pred_check_branch
          %2342 = sbr.rel (%p2340) target = $region120
        $region119: #{bert_classifier_forward.1} parent=107 // pred_region
          %s2344 = ssub.s32 32, 32
          %2345 = vsyncadd [#allocation4], %s2344
          %s2347 = sshll.u32 [#allocation3], 4
          %s2348 = int_to_ptr.vmem [resolvable:$true] %s2347
          %2350 = dma.vmem_to_hbm [thread:$0]  %s2348, 32, %s22, [#allocation4]
        $region120: #{bert_classifier_forward.1} parent=107 // pred_fallthru
          _
        // Predicated region
        $region121: #{bert_classifier_forward.1} parent=107 // pred_check
          %p2351 = pneg %p589
        $region122: #{bert_classifier_forward.1} parent=107 // pred_check_branch
          %2353 = sbr.rel (%p2351) target = $region124
        $region123: #{bert_classifier_forward.1} parent=107 // pred_region
          %2354 = dma.done [#allocation4], 32
        $region124: #{bert_classifier_forward.1} parent=107 // pred_fallthru
          _
      $region108: #{bert_classifier_forward.1} parent=5 // pred_fallthru
        _
      %p2355 = scmp.le.s32.totalorder 2, %s29
      // Predicated region
      $region125: #{bert_classifier_forward.1} parent=5 // pred_check
        %p2356 = pneg %p2355
      $region126: #{bert_classifier_forward.1} parent=5 // pred_check_branch
        %2358 = sbr.rel (%p2356) target = $region128
      $region127: #{bert_classifier_forward.1} parent=5 // pred_region
        %s2359 = ssub.s32 %s29, 2
      $region128: #{bert_classifier_forward.1} parent=5 // pred_fallthru
        _
    $region6: #{bert_classifier_forward.1} parent=1 // loop_footer
      %s33 = sadd.s32 1, %s29
    $region7: #{bert_classifier_forward.1} parent=1 // loop_footer_branch
      %28 = sbr.rel target = $region3
    $region8: #{bert_classifier_forward.1} parent=1 // loop_exit
      _
    %2360 = vsyncpa [#allocation4], 1
    %s2361 = scalar_lea.sflag [#allocation4], 1
    %2362 = vsyncpa %s2361, 1

</llo_original>
